<compile_context>
chip_gen: v6e
topology: v6e:2x2x1
jax: 0.10.0
libtpu: 0.0.40
codegen_flags: <defaults>
</compile_context>

<pallas_src>
import math
import numpy as np

import jax
import jax.numpy as jnp
from jax.experimental import pallas as pl
from jax.experimental.pallas import tpu as pltpu

H_PAD = 128          # lane-dense padded feature width (last dim -> 128 lanes)
ROW_ALIGN = 16       # pad N*B rows up to a multiple of 16 (bf16 sublane tile)


def _sigmoid(z):
    # exp + reciprocal both run on the EUP slot; approx recip keeps the VPU free.
    return pl.reciprocal(1.0 + jnp.exp(-z), approx=True)


# ----------------------------- fused Pallas kernel ------------------------- #
def fused_dde_kernel(dt_ref, idx_ref, slot_ref,             # SMEM per-step scalars
                     y0_ref, s_cat_ref, dxc_ref,            # VMEM data
                     wyg_ref, bg_ref, wt_ref, bt_ref, wo_ref, bo_ref,
                     out_ref,                                # (1, NBP, H_PAD) bf16
                     y_scr, hist_scr, stage_scr):            # carried VMEM state
    i = pl.program_id(0)
    NBP, Hp = y_scr.shape
    D = stage_scr.shape[0] // NBP

    @pl.when(i == 0)
    def _init():
        hist_scr[...] = jnp.zeros_like(hist_scr)             # g.ndata['state'] = 0
        y_scr[...] = y0_ref[...]

    x = y_scr[...]                                           # (NBP, Hp) current y, f32
    x16 = x.astype(jnp.bfloat16)

    # g.ndata['state'][:, int(t / step_size)] = x   (history kept in bf16)
    wslot = pl.multiple_of(idx_ref[i] * NBP, ROW_ALIGN)
    hist_scr[pl.ds(wslot, NBP), :] = x16

    # g.update_all(message, fn.sum('m','s')): delayed gather + weighted
    # scatter-add, decomposed by distinct delay.  Gather the D needed history
    # slices into a contiguous staging buffer (aligned VMEM copies), then ONE
    # matmul against the time-invariant column-concatenated scatter matrix.
    for d in range(D):                                       # D static -> unrolled
        rslot = pl.multiple_of(slot_ref[i * D + d] * NBP, ROW_ALIGN)
        stage_scr[pl.ds(d * NBP, NBP), :] = hist_scr[pl.ds(rslot, NBP), :]
    s = jnp.dot(s_cat_ref[...], stage_scr[...],
                preferred_element_type=jnp.float32)          # (NBP, Hp) f32
    s16 = s.astype(jnp.bfloat16)

    # Fused shared-input matmul: [y | gate_pre] = s @ [w_eff | w_eff @ Wg^T].
    # (s @ w_eff) @ Wg^T == s @ (w_eff @ Wg^T): both halves read s directly.
    yg = jnp.dot(s16, wyg_ref[...], preferred_element_type=jnp.float32)  # (NBP, 2Hp)
    y = yg[:, :Hp]
    gate = _sigmoid(yg[:, Hp:] + bg_ref[...])
    y = (1.0 - gate) * (y - x)

    # y = y * trans_control(funcx(t))   (dxc precomputed per step by XLA)
    y = y * dxc_ref[...].astype(jnp.float32)

    # y = trans_y(relu(y)) ; y = gate_out(y) * y
    y = jnp.maximum(y, 0.0)
    y = jnp.dot(y.astype(jnp.bfloat16), wt_ref[...],
                preferred_element_type=jnp.float32) + bt_ref[...]
    y = _sigmoid(jnp.dot(y.astype(jnp.bfloat16), wo_ref[...],
                         preferred_element_type=jnp.float32) + bo_ref[...]) * y

    # Euler update: y1 = y0 + dt * f(t0, y0); feed back (f32) and emit (bf16).
    y_new = x + dt_ref[i] * y
    y_scr[...] = y_new
    out_ref[0] = y_new.astype(out_ref.dtype)


def make_fused_dde(NBP, D, T, steps):
    Hp = H_PAD
    smem = lambda: pl.BlockSpec(memory_space=pltpu.MemorySpace.SMEM)
    const = lambda shape: pl.BlockSpec(shape, lambda i: (0,) * len(shape))
    in_specs = [
        smem(),                                               # dt   (steps,)   f32
        smem(),                                               # idx  (steps,)   i32
        smem(),                                               # slot (steps*D,) i32
        const((NBP, Hp)),                                     # y0 (padded, f32)
        const((NBP, D * NBP)),                                # S_cat (bf16, static)
        pl.BlockSpec((pl.Squeezed(), NBP, Hp), lambda i: (i, 0, 0)),  # dxc_i bf16
        const((Hp, 2 * Hp)),                                  # [w_eff | w_eff@Wg^T]
        const((1, Hp)),                                       # bg
        const((Hp, Hp)),                                      # Wt^T
        const((1, Hp)),                                       # bt
        const((Hp, Hp)),                                      # Wo^T
        const((1, Hp)),                                       # bo
    ]
    out_spec = pl.BlockSpec((1, NBP, Hp), lambda i: (i, 0, 0))

    # Explicit VMEM budget: bf16 history + staging + resident S_cat/weights +
    # f32 y0/y scratch + double-buffered dxc/out streams.
    vmem_est = (T * NBP * Hp * 2 + D * NBP * Hp * 2 + NBP * D * NBP * 2
                + (2 * Hp * Hp + 2 * Hp * Hp) * 2 + 4 * Hp * 4
                + 2 * NBP * Hp * 4
                + 2 * NBP * Hp * 2 + 2 * NBP * Hp * 2)
    vmem_limit = int(min(64 * 1024 * 1024, max(32 * 1024 * 1024, 2 * vmem_est)))

    fn = pl.pallas_call(
        fused_dde_kernel,
        out_shape=jax.ShapeDtypeStruct((steps, NBP, Hp), jnp.bfloat16),
        grid=(steps,),
        in_specs=in_specs,
        out_specs=out_spec,
        scratch_shapes=[pltpu.VMEM((NBP, Hp), jnp.float32),        # y (carried, f32)
                        pltpu.VMEM((T * NBP, Hp), jnp.bfloat16),   # state history
                        pltpu.VMEM((D * NBP, Hp), jnp.bfloat16)],  # gather staging
        compiler_params=pltpu.CompilerParams(
            dimension_semantics=("arbitrary",),                    # carried state
            vmem_limit_bytes=vmem_limit),
    )
    return jax.jit(fn)


# ------------------------------ Euler solver glue -------------------------- #
def grid_constructor(t, step_size):
    t = np.asarray(t, dtype=np.float64)
    reverse = False
    if t[0] > t[1]:
        t = t[::-1]
        reverse = True
    start_time, end_time = float(t[0]), float(t[-1])
    niters = int(math.ceil((end_time - start_time) / step_size + 1))
    t_infer = np.arange(0, niters, dtype=np.float64) * step_size + start_time
    t_infer[-1] = end_time
    if reverse:
        t_infer = t_infer[::-1]
    return t_infer


def linear_interp(t0, t1, y0, y1, t):
    if t == t0:
        return y0
    if t == t1:
        return y1
    slope = (t - t0) / (t1 - t0)
    return y0 + slope * (y1 - y0)


def build_step_tables(graph, time_grid, step_size, N, B, NBP):
    """Host, once: per-step dt / history-write slot / per-delay gather slots and
    ONE time-invariant column-concatenated per-delay scatter matrix S_cat."""
    src, dst, ew, delay = graph['src'], graph['dst'], graph['ew'], graph['delay']
    E = src.shape[0]
    T = len(time_grid)
    steps = T - 1

    dt_all = np.diff(np.asarray(time_grid, np.float64)).astype(np.float32)
    idx_all = np.array([int(float(t0) / step_size) for t0 in time_grid[:-1]],
                       dtype=np.int32)

    # Group edges by distinct delay: the (dst <- src, weight) scatter pattern
    # per group is time-invariant; only the history slot moves with t.
    uniq = np.unique(np.asarray(delay, np.float64))
    D = len(uniq)
    S_cat = np.zeros((NBP, D * NBP), np.float32)
    for d, dv in enumerate(uniq):
        for e in range(E):
            if float(delay[e]) == dv:
                for b in range(B):
                    S_cat[int(dst[e]) * B + b,
                          d * NBP + int(src[e]) * B + b] += float(ew[e])

    slot_all = np.zeros((steps, D), np.int32)
    for i, t0 in enumerate(time_grid[:-1]):
        for d, dv in enumerate(uniq):
            c = (float(t0) + float(dv)) / step_size
            if c < 0.0:
                c = 0.0
            slot_all[i, d] = int(c)          # same clamp+truncate as the reference
    return dt_all, idx_all, slot_all.reshape(-1), S_cat, D


def ddeint_pallas(params, graph, funcx, y0, t, step_size):
    time_grid = grid_constructor(t, step_size)
    assert time_grid[0] == t[0] and time_grid[-1] == t[-1]
    N, B, H = y0.shape
    NB = N * B
    NBP = ((NB + ROW_ALIGN - 1) // ROW_ALIGN) * ROW_ALIGN
    T = len(time_grid)
    steps = T - 1
    hp = jax.lax.Precision.HIGHEST

    dt_all, idx_all, slot_all, S_cat, D = build_step_tables(
        graph, time_grid, step_size, N, B, NBP)

    # ---- parameter folds (f32 in XLA, cast to bf16 for the MXU) ----
    dclip = jnp.clip(params['d'], 0.0, 1.0)
    weff = jnp.dot(params['w'] * dclip, params['w'].T, precision=hp)     # (H, H)
    wg_eff = jnp.dot(weff, params['Wg'].T, precision=hp)                 # (H, H)

    def pad_mat(m, rows, cols):
        return jnp.zeros((rows, cols), jnp.float32).at[:m.shape[0], :m.shape[1]].set(m)

    def pad_bias(b):
        return jnp.zeros((1, H_PAD), jnp.float32).at[0, :b.shape[0]].set(b)

    wyg = jnp.concatenate([pad_mat(weff, H_PAD, H_PAD),
                           pad_mat(wg_eff, H_PAD, H_PAD)],
                          axis=1).astype(jnp.bfloat16)                   # (Hp, 2Hp)
    wt = pad_mat(params['Wt'].T, H_PAD, H_PAD).astype(jnp.bfloat16)
    wo = pad_mat(params['Wo'].T, H_PAD, H_PAD).astype(jnp.bfloat16)
    bg = pad_bias(params['bg'])
    bt = pad_bias(params['bt'])
    bo = pad_bias(params['bo'])

    # ---- control path: dxc = trans_control(funcx(t0)) precomputed per step ----
    dx_nb = jnp.stack([jnp.transpose(funcx(float(t0)), (1, 0, 2)).reshape(NB, -1)
                       for t0 in time_grid[:-1]])                        # (steps, NB, IN)
    dxc = jnp.einsum('sni,ih->snh', dx_nb, params['Wc'].T,
                     precision=hp) + params['bc']                        # (steps, NB, H)
    dxc_all = (jnp.zeros((steps, NBP, H_PAD), jnp.float32)
               .at[:, :NB, :H].set(dxc)).astype(jnp.bfloat16)

    y0_pad = (jnp.zeros((NBP, H_PAD), jnp.float32)
              .at[:NB, :H].set(y0.reshape(NB, H)))

    step_fn = make_fused_dde(NBP, D, T, steps)
    traj = step_fn(jnp.asarray(dt_all), jnp.asarray(idx_all), jnp.asarray(slot_all),
                   y0_pad, jnp.asarray(S_cat, dtype=jnp.bfloat16), dxc_all,
                   wyg, bg, wt, bt, wo, bo)
    traj = traj[:, :NB, :H].astype(jnp.float32).reshape(steps, N, B, H)

    # Euler bookkeeping / linear interpolation onto the requested t (host glue).
    ys = [y0] + [traj[k] for k in range(steps)]
    solution = [y0]
    j = 1
    for k, (t0, t1) in enumerate(zip(time_grid[:-1], time_grid[1:])):
        t0f, t1f = float(t0), float(t1)
        while j < len(t) and t1f >= t[j]:
            solution.append(linear_interp(t0f, t1f, ys[k], ys[k + 1], float(t[j])))
            j += 1
    return jnp.stack(solution, axis=0)


# -------------------------- pure-JAX f32 reference ------------------------- #
def ddeint_ref(p, graph, funcx, y0, t, step_size):
    time_grid = grid_constructor(t, step_size)
    N, B, H = y0.shape
    T = len(time_grid)
    hist = jnp.zeros((N, T, B, H), jnp.float32)
    hp = jax.lax.Precision.HIGHEST
    src, dst, ew, delay = graph['src'], graph['dst'], graph['ew'], graph['delay']
    weff = jnp.dot(p['w'] * jnp.clip(p['d'], 0.0, 1.0), p['w'].T, precision=hp)

    def func(hist, x, t0):
        idx_t = int(t0 / step_size)
        hist = hist.at[:, idx_t].set(x)
        catch = (t0 + delay) / step_size
        catch = np.where(catch < 0.0, 0.0, catch).astype(np.int64)
        gathered = hist[src, catch]                                  # (E, B, H)
        s = jnp.zeros_like(x).at[dst].add(ew[:, None, None] * gathered)
        y = jnp.einsum('nbh,hk->nbk', s, weff, precision=hp)
        gate = jax.nn.sigmoid(jnp.einsum('nbh,hk->nbk', y, p['Wg'].T,
                                         precision=hp) + p['bg'])
        y = (1.0 - gate) * (y - x)
        dx = jnp.transpose(funcx(t0), (1, 0, 2))
        dxc = jnp.einsum('nbi,ih->nbh', dx, p['Wc'].T, precision=hp) + p['bc']
        y = y * dxc
        y = jnp.maximum(y, 0.0)
        y = jnp.einsum('nbh,hk->nbk', y, p['Wt'].T, precision=hp) + p['bt']
        y = jax.nn.sigmoid(jnp.einsum('nbh,hk->nbk', y, p['Wo'].T,
                                      precision=hp) + p['bo']) * y
        return y, hist

    solution = [y0]
    j = 1
    y_cur = y0
    for t0, t1 in zip(time_grid[:-1], time_grid[1:]):
        t0f, t1f = float(t0), float(t1)
        f0, hist = func(hist, y_cur, t0f)
        y1 = y_cur + (t1f - t0f) * f0
        while j < len(t) and t1f >= t[j]:
            solution.append(linear_interp(t0f, t1f, y_cur, y1, float(t[j])))
            j += 1
        y_cur = y1
    return jnp.stack(solution, axis=0)


# ----------------------------------- main ----------------------------------- #
if __name__ == "__main__":
    N, B, H, IN, E = 6, 2, 32, 4, 10      # nodes, batch, hid_dim, in_dim, edges
    step_size = 0.25

    key = jax.random.PRNGKey(0)
    ks = jax.random.split(key, 12)

    # DDEFunc parameters (wy, wc, auto_regress, BatchNorm exist in __init__ but
    # are unused in forward).
    d = jax.random.uniform(ks[0], (H,), jnp.float32, 0.0, 1.5)
    w = jnp.eye(H, dtype=jnp.float32) + 0.05 * jax.random.normal(ks[1], (H, H), jnp.float32)
    Wg = 0.2 * jax.random.normal(ks[2], (H, H), jnp.float32)
    bg = 0.1 * jax.random.normal(ks[3], (H,), jnp.float32)
    Wc = 0.2 * jax.random.normal(ks[4], (H, IN), jnp.float32)
    bc = 0.1 * jax.random.normal(ks[5], (H,), jnp.float32)
    Wt = 0.2 * jax.random.normal(ks[6], (H, H), jnp.float32)
    bt = 0.1 * jax.random.normal(ks[7], (H,), jnp.float32)
    Wo = 0.2 * jax.random.normal(ks[8], (H, H), jnp.float32)
    bo = 0.1 * jax.random.normal(ks[9], (H,), jnp.float32)

    params = dict(d=d, w=w, Wg=Wg, bg=bg, Wc=Wc, bc=bc, Wt=Wt, bt=bt, Wo=Wo, bo=bo)

    # Synthetic deterministic graph standing in for the DGL graph `g`.
    src = np.array([0, 1, 2, 3, 4, 5, 0, 2, 4, 1], dtype=np.int32)
    dst = np.array([1, 2, 3, 4, 5, 0, 3, 5, 1, 4], dtype=np.int32)
    delay = -step_size * np.array([1, 2, 1, 3, 2, 1, 4, 2, 1, 3], dtype=np.float32)
    ew = (0.3 + 0.05 * np.arange(E)).astype(np.float32)
    graph = dict(src=src, dst=dst, delay=delay, ew=ew)

    # Inputs
    y0 = 0.5 * jax.random.normal(ks[10], (N, B, H), jnp.float32)
    base = 0.5 * jax.random.normal(ks[11], (B, N, IN), jnp.float32)

    def funcx(t):      # control path, (B, N, IN) like the PyTorch funcx(t)
        return base * (1.0 + 0.1 * float(t))

    t = np.array([0.0, 0.5, 1.0], dtype=np.float64)

    sol = jax.block_until_ready(ddeint_pallas(params, graph, funcx, y0, t, step_size))
    sol_ref = jax.block_until_ready(ddeint_ref(params, graph, funcx, y0, t, step_size))

    assert sol.shape == (len(t), N, B, H)
    np.testing.assert_allclose(np.asarray(sol), np.asarray(sol_ref), rtol=2e-2, atol=2e-2)

    print("KERNEL_OK")
</pallas_src>

<mosaic_0001>
module attributes {stable_mosaic.version = 11 : i64} {
  func.func @fused_dde_kernel(%arg0: i32, %arg1: memref<4xf32, #tpu.memory_space<smem>>, %arg2: memref<4xi32, #tpu.memory_space<smem>>, %arg3: memref<16xi32, #tpu.memory_space<smem>>, %arg4: memref<16x128xf32, #tpu.memory_space<vmem>>, %arg5: memref<16x64xbf16, #tpu.memory_space<vmem>>, %arg6: memref<1x16x128xbf16, #tpu.memory_space<vmem>>, %arg7: memref<128x256xbf16, #tpu.memory_space<vmem>>, %arg8: memref<1x128xf32, #tpu.memory_space<vmem>>, %arg9: memref<128x128xbf16, #tpu.memory_space<vmem>>, %arg10: memref<1x128xf32, #tpu.memory_space<vmem>>, %arg11: memref<128x128xbf16, #tpu.memory_space<vmem>>, %arg12: memref<1x128xf32, #tpu.memory_space<vmem>>, %arg13: memref<1x16x128xbf16, #tpu.memory_space<vmem>>, %arg14: memref<16x128xf32, #tpu.memory_space<vmem>>, %arg15: memref<80x128xbf16, #tpu.memory_space<vmem>>, %arg16: memref<64x128xbf16, #tpu.memory_space<vmem>>) attributes {dimension_semantics = [#tpu.dimension_semantics<arbitrary>], iteration_bounds = array<i64: 4>, scalar_prefetch = 0 : i64, scratch_operands = 3 : i64, tpu.core_type = #tpu.core_type<tc>, window_params = [{transform_indices = @transform_0, window_bounds = array<i64: 4>}, {transform_indices = @transform_1, window_bounds = array<i64: 4>}, {transform_indices = @transform_2, window_bounds = array<i64: 16>}, {pipeline_mode = #tpu.pipeline_mode<synchronous>, transform_indices = @transform_3, window_bounds = array<i64: 16, 128>}, {pipeline_mode = #tpu.pipeline_mode<synchronous>, transform_indices = @transform_4, window_bounds = array<i64: 16, 64>}, {transform_indices = @transform_5, window_bounds = array<i64: 1, 16, 128>}, {pipeline_mode = #tpu.pipeline_mode<synchronous>, transform_indices = @transform_6, window_bounds = array<i64: 128, 256>}, {pipeline_mode = #tpu.pipeline_mode<synchronous>, transform_indices = @transform_7, window_bounds = array<i64: 1, 128>}, {pipeline_mode = #tpu.pipeline_mode<synchronous>, transform_indices = @transform_8, window_bounds = array<i64: 128, 128>}, {pipeline_mode = #tpu.pipeline_mode<synchronous>, transform_indices = @transform_9, window_bounds = array<i64: 1, 128>}, {pipeline_mode = #tpu.pipeline_mode<synchronous>, transform_indices = @transform_10, window_bounds = array<i64: 128, 128>}, {pipeline_mode = #tpu.pipeline_mode<synchronous>, transform_indices = @transform_11, window_bounds = array<i64: 1, 128>}, {transform_indices = @transform_12, window_bounds = array<i64: 1, 16, 128>}]} {
    %c0_i32 = arith.constant 0 : i32
    %0 = arith.cmpi eq, %arg0, %c0_i32 : i32
    %1 = arith.extui %0 : i1 to i32
    %c0_i32_0 = arith.constant 0 : i32
    %2 = arith.cmpi ne, %1, %c0_i32_0 : i32
    scf.if %2 {
      %cst_53 = arith.constant 0.000000e+00 : bf16
      %103 = vector.broadcast %cst_53 : bf16 to vector<80x128xbf16>
      %c0_54 = arith.constant 0 : index
      %c0_55 = arith.constant 0 : index
      %104 = vector.load %arg15[%c0_54, %c0_55] : memref<80x128xbf16, #tpu.memory_space<vmem>>, vector<80x128xbf16>
      tpu.vector_store %arg15[%c0_54, %c0_55], %103 {strides = array<i32>} : memref<80x128xbf16, #tpu.memory_space<vmem>>, vector<80x128xbf16>,
      %c0_56 = arith.constant 0 : index
      %c0_57 = arith.constant 0 : index
      %105 = vector.load %arg4[%c0_56, %c0_57] : memref<16x128xf32, #tpu.memory_space<vmem>>, vector<16x128xf32>
      %c0_58 = arith.constant 0 : index
      %c0_59 = arith.constant 0 : index
      %106 = vector.load %arg14[%c0_58, %c0_59] : memref<16x128xf32, #tpu.memory_space<vmem>>, vector<16x128xf32>
      tpu.vector_store %arg14[%c0_58, %c0_59], %105 {strides = array<i32>} : memref<16x128xf32, #tpu.memory_space<vmem>>, vector<16x128xf32>,
    } else {
    }
    %c0 = arith.constant 0 : index
    %c0_1 = arith.constant 0 : index
    %3 = vector.load %arg14[%c0, %c0_1] : memref<16x128xf32, #tpu.memory_space<vmem>>, vector<16x128xf32>
    %4 = arith.truncf %3 : vector<16x128xf32> to vector<16x128xbf16>
    %5 = arith.index_cast %arg0 : i32 to index
    %6 = memref.load %arg2[%5] : memref<4xi32, #tpu.memory_space<smem>>
    %c16_i32 = arith.constant 16 : i32
    %7 = arith.muli %6, %c16_i32 : i32
    %8 = tpu.assume_multiple %7, 16 : i32
    %9 = arith.index_cast %8 : i32 to index
    %c0_2 = arith.constant 0 : index
    %10 = vector.load %arg15[%9, %c0_2] : memref<80x128xbf16, #tpu.memory_space<vmem>>, vector<16x128xbf16>
    tpu.vector_store %arg15[%9, %c0_2], %4 {strides = array<i32>} : memref<80x128xbf16, #tpu.memory_space<vmem>>, vector<16x128xbf16>,
    %c4_i32 = arith.constant 4 : i32
    %11 = arith.muli %arg0, %c4_i32 : i32
    %c0_i32_3 = arith.constant 0 : i32
    %12 = arith.addi %11, %c0_i32_3 : i32
    %13 = arith.index_cast %12 : i32 to index
    %14 = memref.load %arg3[%13] : memref<16xi32, #tpu.memory_space<smem>>
    %c16_i32_4 = arith.constant 16 : i32
    %15 = arith.muli %14, %c16_i32_4 : i32
    %16 = tpu.assume_multiple %15, 16 : i32
    %17 = arith.index_cast %16 : i32 to index
    %c0_5 = arith.constant 0 : index
    %18 = vector.load %arg15[%17, %c0_5] : memref<80x128xbf16, #tpu.memory_space<vmem>>, vector<16x128xbf16>
    %c0_6 = arith.constant 0 : index
    %c0_7 = arith.constant 0 : index
    %19 = vector.load %arg16[%c0_6, %c0_7] : memref<64x128xbf16, #tpu.memory_space<vmem>>, vector<16x128xbf16>
    tpu.vector_store %arg16[%c0_6, %c0_7], %18 {strides = array<i32>} : memref<64x128xbf16, #tpu.memory_space<vmem>>, vector<16x128xbf16>,
    %c4_i32_8 = arith.constant 4 : i32
    %20 = arith.muli %arg0, %c4_i32_8 : i32
    %c1_i32 = arith.constant 1 : i32
    %21 = arith.addi %20, %c1_i32 : i32
    %22 = arith.index_cast %21 : i32 to index
    %23 = memref.load %arg3[%22] : memref<16xi32, #tpu.memory_space<smem>>
    %c16_i32_9 = arith.constant 16 : i32
    %24 = arith.muli %23, %c16_i32_9 : i32
    %25 = tpu.assume_multiple %24, 16 : i32
    %26 = arith.index_cast %25 : i32 to index
    %c0_10 = arith.constant 0 : index
    %27 = vector.load %arg15[%26, %c0_10] : memref<80x128xbf16, #tpu.memory_space<vmem>>, vector<16x128xbf16>
    %c16 = arith.constant 16 : index
    %c0_11 = arith.constant 0 : index
    %28 = vector.load %arg16[%c16, %c0_11] : memref<64x128xbf16, #tpu.memory_space<vmem>>, vector<16x128xbf16>
    tpu.vector_store %arg16[%c16, %c0_11], %27 {strides = array<i32>} : memref<64x128xbf16, #tpu.memory_space<vmem>>, vector<16x128xbf16>,
    %c4_i32_12 = arith.constant 4 : i32
    %29 = arith.muli %arg0, %c4_i32_12 : i32
    %c2_i32 = arith.constant 2 : i32
    %30 = arith.addi %29, %c2_i32 : i32
    %31 = arith.index_cast %30 : i32 to index
    %32 = memref.load %arg3[%31] : memref<16xi32, #tpu.memory_space<smem>>
    %c16_i32_13 = arith.constant 16 : i32
    %33 = arith.muli %32, %c16_i32_13 : i32
    %34 = tpu.assume_multiple %33, 16 : i32
    %35 = arith.index_cast %34 : i32 to index
    %c0_14 = arith.constant 0 : index
    %36 = vector.load %arg15[%35, %c0_14] : memref<80x128xbf16, #tpu.memory_space<vmem>>, vector<16x128xbf16>
    %c32 = arith.constant 32 : index
    %c0_15 = arith.constant 0 : index
    %37 = vector.load %arg16[%c32, %c0_15] : memref<64x128xbf16, #tpu.memory_space<vmem>>, vector<16x128xbf16>
    tpu.vector_store %arg16[%c32, %c0_15], %36 {strides = array<i32>} : memref<64x128xbf16, #tpu.memory_space<vmem>>, vector<16x128xbf16>,
    %c4_i32_16 = arith.constant 4 : i32
    %38 = arith.muli %arg0, %c4_i32_16 : i32
    %c3_i32 = arith.constant 3 : i32
    %39 = arith.addi %38, %c3_i32 : i32
    %40 = arith.index_cast %39 : i32 to index
    %41 = memref.load %arg3[%40] : memref<16xi32, #tpu.memory_space<smem>>
    %c16_i32_17 = arith.constant 16 : i32
    %42 = arith.muli %41, %c16_i32_17 : i32
    %43 = tpu.assume_multiple %42, 16 : i32
    %44 = arith.index_cast %43 : i32 to index
    %c0_18 = arith.constant 0 : index
    %45 = vector.load %arg15[%44, %c0_18] : memref<80x128xbf16, #tpu.memory_space<vmem>>, vector<16x128xbf16>
    %c48 = arith.constant 48 : index
    %c0_19 = arith.constant 0 : index
    %46 = vector.load %arg16[%c48, %c0_19] : memref<64x128xbf16, #tpu.memory_space<vmem>>, vector<16x128xbf16>
    tpu.vector_store %arg16[%c48, %c0_19], %45 {strides = array<i32>} : memref<64x128xbf16, #tpu.memory_space<vmem>>, vector<16x128xbf16>,
    %c0_20 = arith.constant 0 : index
    %c0_21 = arith.constant 0 : index
    %47 = vector.load %arg5[%c0_20, %c0_21] : memref<16x64xbf16, #tpu.memory_space<vmem>>, vector<16x64xbf16>
    %c0_22 = arith.constant 0 : index
    %c0_23 = arith.constant 0 : index
    %48 = vector.load %arg16[%c0_22, %c0_23] : memref<64x128xbf16, #tpu.memory_space<vmem>>, vector<64x128xbf16>
    %cst = arith.constant dense<0.000000e+00> : vector<16x128xf32>
    %49 = tpu.matmul %47, %48, %cst {dimension_numbers = #tpu.dot_dimension_numbers<[1], [0], [0], [1], [0, 0, 1, 1], [], []>} : vector<16x64xbf16>, vector<64x128xbf16>, vector<16x128xf32> -> vector<16x128xf32>
    %50 = arith.truncf %49 : vector<16x128xf32> to vector<16x128xbf16>
    %c0_24 = arith.constant 0 : index
    %c0_25 = arith.constant 0 : index
    %51 = vector.load %arg7[%c0_24, %c0_25] : memref<128x256xbf16, #tpu.memory_space<vmem>>, vector<128x256xbf16>
    %cst_26 = arith.constant dense<0.000000e+00> : vector<16x256xf32>
    %52 = tpu.matmul %50, %51, %cst_26 {dimension_numbers = #tpu.dot_dimension_numbers<[1], [0], [0], [1], [0, 0, 1, 1], [], []>} : vector<16x128xbf16>, vector<128x256xbf16>, vector<16x256xf32> -> vector<16x256xf32>
    %53 = vector.extract_strided_slice %52 {offsets = [0, 0], sizes = [16, 128], strides = [1, 1]} : vector<16x256xf32> to vector<16x128xf32>
    %54 = vector.extract_strided_slice %52 {offsets = [0, 128], sizes = [16, 128], strides = [1, 1]} : vector<16x256xf32> to vector<16x128xf32>
    %c0_27 = arith.constant 0 : index
    %c0_28 = arith.constant 0 : index
    %55 = vector.load %arg8[%c0_27, %c0_28] : memref<1x128xf32, #tpu.memory_space<vmem>>, vector<1x128xf32>
    %56 = vector.broadcast %55 : vector<1x128xf32> to vector<16x128xf32>
    %57 = arith.addf %54, %56 : vector<16x128xf32>
    %cst_29 = arith.constant 0.000000e+00 : f32
    %58 = vector.broadcast %cst_29 : f32 to vector<16x128xf32>
    %59 = arith.subf %58, %57 : vector<16x128xf32>
    %60 = math.exp %59 : vector<16x128xf32>
    %cst_30 = arith.constant 1.000000e+00 : f32
    %61 = vector.broadcast %cst_30 : f32 to vector<16x128xf32>
    %62 = arith.addf %61, %60 : vector<16x128xf32>
    %63 = tpu.reciprocal %62 {approx = true} : vector<16x128xf32> -> vector<16x128xf32>
    %cst_31 = arith.constant 1.000000e+00 : f32
    %64 = vector.broadcast %cst_31 : f32 to vector<16x128xf32>
    %65 = arith.subf %64, %63 : vector<16x128xf32>
    %66 = arith.subf %53, %3 : vector<16x128xf32>
    %67 = arith.mulf %65, %66 : vector<16x128xf32>
    %c0_32 = arith.constant 0 : index
    %c0_33 = arith.constant 0 : index
    %c0_34 = arith.constant 0 : index
    %68 = vector.load %arg6[%c0_32, %c0_33, %c0_34] : memref<1x16x128xbf16, #tpu.memory_space<vmem>>, vector<1x16x128xbf16>
    %69 = vector.shape_cast %68 : vector<1x16x128xbf16> to vector<16x128xbf16>
    %70 = arith.extf %69 : vector<16x128xbf16> to vector<16x128xf32>
    %71 = arith.mulf %67, %70 : vector<16x128xf32>
    %cst_35 = arith.constant 0.000000e+00 : f32
    %72 = vector.broadcast %cst_35 : f32 to vector<16x128xf32>
    %73 = arith.maximumf %71, %72 : vector<16x128xf32>
    %74 = arith.truncf %73 : vector<16x128xf32> to vector<16x128xbf16>
    %c0_36 = arith.constant 0 : index
    %c0_37 = arith.constant 0 : index
    %75 = vector.load %arg9[%c0_36, %c0_37] : memref<128x128xbf16, #tpu.memory_space<vmem>>, vector<128x128xbf16>
    %cst_38 = arith.constant dense<0.000000e+00> : vector<16x128xf32>
    %76 = tpu.matmul %74, %75, %cst_38 {dimension_numbers = #tpu.dot_dimension_numbers<[1], [0], [0], [1], [0, 0, 1, 1], [], []>} : vector<16x128xbf16>, vector<128x128xbf16>, vector<16x128xf32> -> vector<16x128xf32>
    %c0_39 = arith.constant 0 : index
    %c0_40 = arith.constant 0 : index
    %77 = vector.load %arg10[%c0_39, %c0_40] : memref<1x128xf32, #tpu.memory_space<vmem>>, vector<1x128xf32>
    %78 = vector.broadcast %77 : vector<1x128xf32> to vector<16x128xf32>
    %79 = arith.addf %76, %78 : vector<16x128xf32>
    %80 = arith.truncf %79 : vector<16x128xf32> to vector<16x128xbf16>
    %c0_41 = arith.constant 0 : index
    %c0_42 = arith.constant 0 : index
    %81 = vector.load %arg11[%c0_41, %c0_42] : memref<128x128xbf16, #tpu.memory_space<vmem>>, vector<128x128xbf16>
    %cst_43 = arith.constant dense<0.000000e+00> : vector<16x128xf32>
    %82 = tpu.matmul %80, %81, %cst_43 {dimension_numbers = #tpu.dot_dimension_numbers<[1], [0], [0], [1], [0, 0, 1, 1], [], []>} : vector<16x128xbf16>, vector<128x128xbf16>, vector<16x128xf32> -> vector<16x128xf32>
    %c0_44 = arith.constant 0 : index
    %c0_45 = arith.constant 0 : index
    %83 = vector.load %arg12[%c0_44, %c0_45] : memref<1x128xf32, #tpu.memory_space<vmem>>, vector<1x128xf32>
    %84 = vector.broadcast %83 : vector<1x128xf32> to vector<16x128xf32>
    %85 = arith.addf %82, %84 : vector<16x128xf32>
    %cst_46 = arith.constant 0.000000e+00 : f32
    %86 = vector.broadcast %cst_46 : f32 to vector<16x128xf32>
    %87 = arith.subf %86, %85 : vector<16x128xf32>
    %88 = math.exp %87 : vector<16x128xf32>
    %cst_47 = arith.constant 1.000000e+00 : f32
    %89 = vector.broadcast %cst_47 : f32 to vector<16x128xf32>
    %90 = arith.addf %89, %88 : vector<16x128xf32>
    %91 = tpu.reciprocal %90 {approx = true} : vector<16x128xf32> -> vector<16x128xf32>
    %92 = arith.mulf %91, %79 : vector<16x128xf32>
    %93 = arith.index_cast %arg0 : i32 to index
    %94 = memref.load %arg1[%93] : memref<4xf32, #tpu.memory_space<smem>>
    %95 = vector.broadcast %94 : f32 to vector<16x128xf32>
    %96 = arith.mulf %95, %92 : vector<16x128xf32>
    %97 = arith.addf %3, %96 : vector<16x128xf32>
    %c0_48 = arith.constant 0 : index
    %c0_49 = arith.constant 0 : index
    %98 = vector.load %arg14[%c0_48, %c0_49] : memref<16x128xf32, #tpu.memory_space<vmem>>, vector<16x128xf32>
    tpu.vector_store %arg14[%c0_48, %c0_49], %97 {strides = array<i32>} : memref<16x128xf32, #tpu.memory_space<vmem>>, vector<16x128xf32>,
    %99 = arith.truncf %97 : vector<16x128xf32> to vector<16x128xbf16>
    %c0_50 = arith.constant 0 : index
    %c0_51 = arith.constant 0 : index
    %c0_52 = arith.constant 0 : index
    %100 = vector.load %arg13[%c0_50, %c0_51, %c0_52] : memref<1x16x128xbf16, #tpu.memory_space<vmem>>, vector<1x16x128xbf16>
    %101 = vector.shape_cast %100 : vector<1x16x128xbf16> to vector<16x128xbf16>
    %102 = vector.shape_cast %99 : vector<16x128xbf16> to vector<1x16x128xbf16>
    tpu.vector_store %arg13[%c0_50, %c0_51, %c0_52], %102 {strides = array<i32>} : memref<1x16x128xbf16, #tpu.memory_space<vmem>>, vector<1x16x128xbf16>,
    return
  }
  func.func @transform_0(%arg0: i32) -> i32 {
    %c0_i32 = arith.constant 0 : i32
    %c0_i32_0 = arith.constant 0 : i32
    return %c0_i32 : i32
  }
  func.func @transform_1(%arg0: i32) -> i32 {
    %c0_i32 = arith.constant 0 : i32
    %c0_i32_0 = arith.constant 0 : i32
    return %c0_i32 : i32
  }
  func.func @transform_2(%arg0: i32) -> i32 {
    %c0_i32 = arith.constant 0 : i32
    %c0_i32_0 = arith.constant 0 : i32
    return %c0_i32 : i32
  }
  func.func @transform_3(%arg0: i32) -> (i32, i32) {
    %c0_i32 = arith.constant 0 : i32
    %c0_i32_0 = arith.constant 0 : i32
    %c0_i32_1 = arith.constant 0 : i32
    return %c0_i32, %c0_i32_0 : i32, i32
  }
  func.func @transform_4(%arg0: i32) -> (i32, i32) {
    %c0_i32 = arith.constant 0 : i32
    %c0_i32_0 = arith.constant 0 : i32
    %c0_i32_1 = arith.constant 0 : i32
    return %c0_i32, %c0_i32_0 : i32, i32
  }
  func.func @transform_5(%arg0: i32) -> (i32, i32, i32) {
    %c0_i32 = arith.constant 0 : i32
    %c0_i32_0 = arith.constant 0 : i32
    %c0_i32_1 = arith.constant 0 : i32
    return %arg0, %c0_i32, %c0_i32_0 : i32, i32, i32
  }
  func.func @transform_6(%arg0: i32) -> (i32, i32) {
    %c0_i32 = arith.constant 0 : i32
    %c0_i32_0 = arith.constant 0 : i32
    %c0_i32_1 = arith.constant 0 : i32
    return %c0_i32, %c0_i32_0 : i32, i32
  }
  func.func @transform_7(%arg0: i32) -> (i32, i32) {
    %c0_i32 = arith.constant 0 : i32
    %c0_i32_0 = arith.constant 0 : i32
    %c0_i32_1 = arith.constant 0 : i32
    return %c0_i32, %c0_i32_0 : i32, i32
  }
  func.func @transform_8(%arg0: i32) -> (i32, i32) {
    %c0_i32 = arith.constant 0 : i32
    %c0_i32_0 = arith.constant 0 : i32
    %c0_i32_1 = arith.constant 0 : i32
    return %c0_i32, %c0_i32_0 : i32, i32
  }
  func.func @transform_9(%arg0: i32) -> (i32, i32) {
    %c0_i32 = arith.constant 0 : i32
    %c0_i32_0 = arith.constant 0 : i32
    %c0_i32_1 = arith.constant 0 : i32
    return %c0_i32, %c0_i32_0 : i32, i32
  }
  func.func @transform_10(%arg0: i32) -> (i32, i32) {
    %c0_i32 = arith.constant 0 : i32
    %c0_i32_0 = arith.constant 0 : i32
    %c0_i32_1 = arith.constant 0 : i32
    return %c0_i32, %c0_i32_0 : i32, i32
  }
  func.func @transform_11(%arg0: i32) -> (i32, i32) {
    %c0_i32 = arith.constant 0 : i32
    %c0_i32_0 = arith.constant 0 : i32
    %c0_i32_1 = arith.constant 0 : i32
    return %c0_i32, %c0_i32_0 : i32, i32
  }
  func.func @transform_12(%arg0: i32) -> (i32, i32, i32) {
    %c0_i32 = arith.constant 0 : i32
    %c0_i32_0 = arith.constant 0 : i32
    %c0_i32_1 = arith.constant 0 : i32
    return %arg0, %c0_i32, %c0_i32_0 : i32, i32, i32
  }
}

</mosaic_0001>

<llo_original>
// kernel: tpu_custom_call.1
$region0: #{tpu_custom_call.1}
  #allocation0 [shape = 'u32[]', space=smem, size = 0x4, offset = 0x4, fixed_abs, tag = 'smem constant byte address 0x4 - core index']
  #allocation1 [shape = 'u32[144,128]{1,0:T(1,128)}', space=vmem, size = 0x12000, scoped, tag = 'internal scratch']
  #allocation2 [shape = 'f32[16,128]{1,0:T(8,128)}', space=vmem, size = 0x2000, scoped, tag = 'scratch operand']
  #allocation3 [shape = 'bf16[80,128]{1,0:T(8,128)(2,1)}', space=vmem, size = 0x5000, scoped, tag = 'scratch operand']
  #allocation4 [shape = 'bf16[64,128]{1,0:T(8,128)(2,1)}', space=vmem, size = 0x4000, scoped, tag = 'scratch operand']
  %s0 = inlined_call_operand.hbm [shape: f32[4], index: 0, kind: input, shape index: {}]
  %s1 = inlined_call_operand.vmem [shape: s32[4], index: 1, kind: input, shape index: {}]
  %s2 = inlined_call_operand.vmem [shape: s32[16], index: 2, kind: input, shape index: {}]
  %s3 = inlined_call_operand.hbm [shape: f32[16,128], index: 3, kind: input, shape index: {}]
  %s4 = inlined_call_operand.hbm [shape: bf16[16,64], index: 4, kind: input, shape index: {}]
  %s5 = inlined_call_operand.hbm [shape: bf16[4,16,128], index: 5, kind: input, shape index: {}]
  %s6 = inlined_call_operand.hbm [shape: bf16[128,256], index: 6, kind: input, shape index: {}]
  %s7 = inlined_call_operand.vmem [shape: f32[1,128], index: 7, kind: input, shape index: {}]
  %s8 = inlined_call_operand.hbm [shape: bf16[128,128], index: 8, kind: input, shape index: {}]
  %s9 = inlined_call_operand.vmem [shape: f32[1,128], index: 9, kind: input, shape index: {}]
  %s10 = inlined_call_operand.hbm [shape: bf16[128,128], index: 10, kind: input, shape index: {}]
  %s11 = inlined_call_operand.vmem [shape: f32[1,128], index: 11, kind: input, shape index: {}]
  %s12 = inlined_call_operand.hbm [shape: bf16[4,16,128], index: 12, kind: output, shape index: {}]
  %s13 = sld [smem:[#allocation0]]
  $region121: #{tpu_custom_call.1} parent=0
    _
  %s15 = ssub.s32 1, %s13
  %s16 = scalar_select 0, %s15, %s13
  $region1: #{tpu_custom_call.1} parent=0
    #allocation5 [shape = 'u8[512]{0}', space=smem, size = 0x200, scoped, tag = 'input window, operand 0, single buffered']
    #allocation6 [shape = 's32[2]{0}', space=sflag, size = 0x8, scoped, tag = 'scoped memory for tpu_custom_call.1']
    #allocation7 [shape = 's32[2]{0}', space=sflag, size = 0x8, scoped, tag = 'scoped memory for tpu_custom_call.1']
    #allocation8 [shape = 's32[2]{0}', space=sflag, size = 0x8, scoped, tag = 'scoped memory for tpu_custom_call.1']
    #allocation9 [shape = 's32[2]{0}', space=sflag, size = 0x8, scoped, tag = 'scoped memory for tpu_custom_call.1']
    #allocation10 [shape = 'u8[512]{0}', space=smem, size = 0x200, scoped, tag = 'input window, operand 1, single buffered']
    #allocation11 [shape = 'u8[512]{0}', space=smem, size = 0x200, scoped, tag = 'input window, operand 2, single buffered']
    #allocation12 [shape = 's32[1]{0}', space=sflag, size = 0x4, scoped, tag = 'scoped memory for tpu_custom_call.1']
    #allocation13 [shape = 'u8[8192]{0}', space=vmem, size = 0x2000, scoped, tag = 'input window, operand 3, single buffered']
    #allocation14 [shape = 'u8[4096]{0}', space=vmem, size = 0x1000, scoped, tag = 'input window, operand 4, single buffered']
    #allocation15 [shape = 's32[1]{0}', space=sflag, size = 0x4, scoped, tag = 'scoped memory for tpu_custom_call.1']
    #allocation16 [shape = 'u8[8192]{0}', space=vmem, size = 0x2000, scoped, tag = 'input window, operand 5']
    #allocation17 [shape = 'u8[65536]{0}', space=vmem, size = 0x10000, scoped, tag = 'input window, operand 6, single buffered']
    #allocation18 [shape = 'u8[32768]{0}', space=vmem, size = 0x8000, scoped, tag = 'input window, operand 8, single buffered']
    #allocation19 [shape = 's32[1]{0}', space=sflag, size = 0x4, scoped, tag = 'scoped memory for tpu_custom_call.1']
    #allocation20 [shape = 'u8[32768]{0}', space=vmem, size = 0x8000, scoped, tag = 'input window, operand 10, single buffered']
    #allocation21 [shape = 'u8[8192]{0}', space=vmem, size = 0x2000, scoped, tag = 'output window, operand 0']
    %17 = vsyncpa [#allocation8], 0
    %18 = vsyncpa [#allocation9], 0
    %19 = vsyncpa [#allocation12], 0
    %20 = vsyncpa [#allocation6], 0
    %21 = vsyncpa [#allocation15], 0
    %22 = vsyncpa [#allocation19], 0
    %23 = vsyncpa [#allocation7], 0
    %s24 = scalar_lea.sflag [#allocation7], 1
    %25 = vsyncpa %s24, 0
    loop: start=0, step=1, limit=6
    $region2: #{tpu_custom_call.1} parent=1 // loop_pre_header
      _
    $region3: #{tpu_custom_call.1} parent=1 // loop_header
      %s27 = sphi 0, %s31
      %p28 = scmp.ge.s32.totalorder %s27, 6
      %s35 = sphi 0, %s35
      %s37 = sphi 0, %s35
      %s38 = sphi 0, %s37
      %s52 = sphi 0, %s38
      %s56 = sphi 0, %s56
      %s58 = sphi 0, %s56
      %s59 = sphi 0, %s58
      %s73 = sphi 0, %s59
      %s77 = sphi 0, %s77
      %s79 = sphi 0, %s77
      %s80 = sphi 0, %s79
      %s94 = sphi 0, %s80
      %s98 = sphi 0, %s98
      %s100 = sphi 0, %s98
      %s101 = sphi 0, %s100
      %s115 = sphi 0, %s101
      %s119 = sphi 0, %s119
      %s121 = sphi 0, %s119
      %s122 = sphi 0, %s121
      %s136 = sphi 0, %s122
      %s142 = sphi 0, %s144
      %s145 = sphi 0, %s142
      %s146 = sphi 0, %s145
      %s162 = sphi 0, %s146
      %s166 = sphi 0, %s166
      %s168 = sphi 0, %s166
      %s169 = sphi 0, %s168
      %s183 = sphi 0, %s169
      %s187 = sphi 0, %s187
      %s189 = sphi 0, %s187
      %s190 = sphi 0, %s189
      %s204 = sphi 0, %s190
      %s208 = sphi 0, %s208
      %s210 = sphi 0, %s208
      %s211 = sphi 0, %s210
      %s225 = sphi 0, %s211
      %s229 = sphi 0, %s229
      %s231 = sphi 0, %s229
      %s232 = sphi 0, %s231
      %s246 = sphi 0, %s232
      %s250 = sphi 0, %s250
      %s252 = sphi 0, %s250
      %s253 = sphi 0, %s252
      %s267 = sphi 0, %s253
      %s271 = sphi 0, %s271
      %s273 = sphi 0, %s271
      %s274 = sphi 0, %s273
      %s288 = sphi 0, %s274
      %s294 = sphi 0, %s296
      %s297 = sphi 0, %s294
      %s298 = sphi 0, %s297
      %s314 = sphi 0, %s298
    $region4: #{tpu_custom_call.1} parent=1 // loop_header_branch
      %30 = sbr.rel (%p28) target = $region8
    $region5: #{tpu_custom_call.1} parent=1 // loop_body
      %s32 = ssub.s32 %s27, 1
      %s33 = ssub.s32 %s27, 2
      %s34 = sadd.s32 %s27, 1
      %s36 = sadd.s32 %s35, 1
      %p39 = scmp.eq.s32.totalorder %s27, 3
      %p40 = scmp.ne.s32.totalorder %s35, %s37
      %p41 = scmp.eq.s32.totalorder %s27, 0
      %p42 = por %p40, %p41
      %p43 = scmp.ne.s32.totalorder %s35, %s37
      %p44 = scmp.eq.s32.totalorder %s32, 3
      %p45 = por %p43, %p44
      %p46 = scmp.ne.s32.totalorder %s37, %s38
      %p47 = scmp.eq.s32.totalorder %s32, 0
      %p48 = por %p46, %p47
      %p49 = scmp.ne.s32.totalorder %s37, %s38
      %p50 = scmp.eq.s32.totalorder %s33, 3
      %p51 = por %p49, %p50
      %p53 = scmp.ne.s32.totalorder %s38, %s52
      %p54 = scmp.eq.s32.totalorder %s33, 0
      %p55 = por %p53, %p54
      %s57 = sadd.s32 %s56, 1
      %p60 = scmp.eq.s32.totalorder %s27, 3
      %p61 = scmp.ne.s32.totalorder %s56, %s58
      %p62 = scmp.eq.s32.totalorder %s27, 0
      %p63 = por %p61, %p62
      %p64 = scmp.ne.s32.totalorder %s56, %s58
      %p65 = scmp.eq.s32.totalorder %s32, 3
      %p66 = por %p64, %p65
      %p67 = scmp.ne.s32.totalorder %s58, %s59
      %p68 = scmp.eq.s32.totalorder %s32, 0
      %p69 = por %p67, %p68
      %p70 = scmp.ne.s32.totalorder %s58, %s59
      %p71 = scmp.eq.s32.totalorder %s33, 3
      %p72 = por %p70, %p71
      %p74 = scmp.ne.s32.totalorder %s59, %s73
      %p75 = scmp.eq.s32.totalorder %s33, 0
      %p76 = por %p74, %p75
      %s78 = sadd.s32 %s77, 1
      %p81 = scmp.eq.s32.totalorder %s27, 3
      %p82 = scmp.ne.s32.totalorder %s77, %s79
      %p83 = scmp.eq.s32.totalorder %s27, 0
      %p84 = por %p82, %p83
      %p85 = scmp.ne.s32.totalorder %s77, %s79
      %p86 = scmp.eq.s32.totalorder %s32, 3
      %p87 = por %p85, %p86
      %p88 = scmp.ne.s32.totalorder %s79, %s80
      %p89 = scmp.eq.s32.totalorder %s32, 0
      %p90 = por %p88, %p89
      %p91 = scmp.ne.s32.totalorder %s79, %s80
      %p92 = scmp.eq.s32.totalorder %s33, 3
      %p93 = por %p91, %p92
      %p95 = scmp.ne.s32.totalorder %s80, %s94
      %p96 = scmp.eq.s32.totalorder %s33, 0
      %p97 = por %p95, %p96
      %s99 = sadd.s32 %s98, 1
      %p102 = scmp.eq.s32.totalorder %s27, 3
      %p103 = scmp.ne.s32.totalorder %s98, %s100
      %p104 = scmp.eq.s32.totalorder %s27, 0
      %p105 = por %p103, %p104
      %p106 = scmp.ne.s32.totalorder %s98, %s100
      %p107 = scmp.eq.s32.totalorder %s32, 3
      %p108 = por %p106, %p107
      %p109 = scmp.ne.s32.totalorder %s100, %s101
      %p110 = scmp.eq.s32.totalorder %s32, 0
      %p111 = por %p109, %p110
      %p112 = scmp.ne.s32.totalorder %s100, %s101
      %p113 = scmp.eq.s32.totalorder %s33, 3
      %p114 = por %p112, %p113
      %p116 = scmp.ne.s32.totalorder %s101, %s115
      %p117 = scmp.eq.s32.totalorder %s33, 0
      %p118 = por %p116, %p117
      %s120 = sadd.s32 %s119, 1
      %p123 = scmp.eq.s32.totalorder %s27, 3
      %p124 = scmp.ne.s32.totalorder %s119, %s121
      %p125 = scmp.eq.s32.totalorder %s27, 0
      %p126 = por %p124, %p125
      %p127 = scmp.ne.s32.totalorder %s119, %s121
      %p128 = scmp.eq.s32.totalorder %s32, 3
      %p129 = por %p127, %p128
      %p130 = scmp.ne.s32.totalorder %s121, %s122
      %p131 = scmp.eq.s32.totalorder %s32, 0
      %p132 = por %p130, %p131
      %p133 = scmp.ne.s32.totalorder %s121, %s122
      %p134 = scmp.eq.s32.totalorder %s33, 3
      %p135 = por %p133, %p134
      %p137 = scmp.ne.s32.totalorder %s122, %s136
      %p138 = scmp.eq.s32.totalorder %s33, 0
      %p139 = por %p137, %p138
      %s140 = ssub.s32 %s27, %s34
      %p141 = scmp.eq.s32.totalorder %s140, 0
      %s143 = sadd.s32 %s142, 1
      %s144 = scalar_select %p141, %s142, %s143
      %p147 = pneg %p141
      %p148 = scmp.eq.s32.totalorder %s27, 3
      %p149 = por %p147, %p148
      %p150 = scmp.ne.s32.totalorder %s142, %s145
      %p151 = scmp.eq.s32.totalorder %s27, 0
      %p152 = por %p150, %p151
      %p153 = scmp.ne.s32.totalorder %s142, %s145
      %p154 = scmp.eq.s32.totalorder %s32, 3
      %p155 = por %p153, %p154
      %p156 = scmp.ne.s32.totalorder %s145, %s146
      %p157 = scmp.eq.s32.totalorder %s32, 0
      %p158 = por %p156, %p157
      %p159 = scmp.ne.s32.totalorder %s145, %s146
      %p160 = scmp.eq.s32.totalorder %s33, 3
      %p161 = por %p159, %p160
      %p163 = scmp.ne.s32.totalorder %s146, %s162
      %p164 = scmp.eq.s32.totalorder %s33, 0
      %p165 = por %p163, %p164
      %s167 = sadd.s32 %s166, 1
      %p170 = scmp.eq.s32.totalorder %s27, 3
      %p171 = scmp.ne.s32.totalorder %s166, %s168
      %p172 = scmp.eq.s32.totalorder %s27, 0
      %p173 = por %p171, %p172
      %p174 = scmp.ne.s32.totalorder %s166, %s168
      %p175 = scmp.eq.s32.totalorder %s32, 3
      %p176 = por %p174, %p175
      %p177 = scmp.ne.s32.totalorder %s168, %s169
      %p178 = scmp.eq.s32.totalorder %s32, 0
      %p179 = por %p177, %p178
      %p180 = scmp.ne.s32.totalorder %s168, %s169
      %p181 = scmp.eq.s32.totalorder %s33, 3
      %p182 = por %p180, %p181
      %p184 = scmp.ne.s32.totalorder %s169, %s183
      %p185 = scmp.eq.s32.totalorder %s33, 0
      %p186 = por %p184, %p185
      %s188 = sadd.s32 %s187, 1
      %p191 = scmp.eq.s32.totalorder %s27, 3
      %p192 = scmp.ne.s32.totalorder %s187, %s189
      %p193 = scmp.eq.s32.totalorder %s27, 0
      %p194 = por %p192, %p193
      %p195 = scmp.ne.s32.totalorder %s187, %s189
      %p196 = scmp.eq.s32.totalorder %s32, 3
      %p197 = por %p195, %p196
      %p198 = scmp.ne.s32.totalorder %s189, %s190
      %p199 = scmp.eq.s32.totalorder %s32, 0
      %p200 = por %p198, %p199
      %p201 = scmp.ne.s32.totalorder %s189, %s190
      %p202 = scmp.eq.s32.totalorder %s33, 3
      %p203 = por %p201, %p202
      %p205 = scmp.ne.s32.totalorder %s190, %s204
      %p206 = scmp.eq.s32.totalorder %s33, 0
      %p207 = por %p205, %p206
      %s209 = sadd.s32 %s208, 1
      %p212 = scmp.eq.s32.totalorder %s27, 3
      %p213 = scmp.ne.s32.totalorder %s208, %s210
      %p214 = scmp.eq.s32.totalorder %s27, 0
      %p215 = por %p213, %p214
      %p216 = scmp.ne.s32.totalorder %s208, %s210
      %p217 = scmp.eq.s32.totalorder %s32, 3
      %p218 = por %p216, %p217
      %p219 = scmp.ne.s32.totalorder %s210, %s211
      %p220 = scmp.eq.s32.totalorder %s32, 0
      %p221 = por %p219, %p220
      %p222 = scmp.ne.s32.totalorder %s210, %s211
      %p223 = scmp.eq.s32.totalorder %s33, 3
      %p224 = por %p222, %p223
      %p226 = scmp.ne.s32.totalorder %s211, %s225
      %p227 = scmp.eq.s32.totalorder %s33, 0
      %p228 = por %p226, %p227
      %s230 = sadd.s32 %s229, 1
      %p233 = scmp.eq.s32.totalorder %s27, 3
      %p234 = scmp.ne.s32.totalorder %s229, %s231
      %p235 = scmp.eq.s32.totalorder %s27, 0
      %p236 = por %p234, %p235
      %p237 = scmp.ne.s32.totalorder %s229, %s231
      %p238 = scmp.eq.s32.totalorder %s32, 3
      %p239 = por %p237, %p238
      %p240 = scmp.ne.s32.totalorder %s231, %s232
      %p241 = scmp.eq.s32.totalorder %s32, 0
      %p242 = por %p240, %p241
      %p243 = scmp.ne.s32.totalorder %s231, %s232
      %p244 = scmp.eq.s32.totalorder %s33, 3
      %p245 = por %p243, %p244
      %p247 = scmp.ne.s32.totalorder %s232, %s246
      %p248 = scmp.eq.s32.totalorder %s33, 0
      %p249 = por %p247, %p248
      %s251 = sadd.s32 %s250, 1
      %p254 = scmp.eq.s32.totalorder %s27, 3
      %p255 = scmp.ne.s32.totalorder %s250, %s252
      %p256 = scmp.eq.s32.totalorder %s27, 0
      %p257 = por %p255, %p256
      %p258 = scmp.ne.s32.totalorder %s250, %s252
      %p259 = scmp.eq.s32.totalorder %s32, 3
      %p260 = por %p258, %p259
      %p261 = scmp.ne.s32.totalorder %s252, %s253
      %p262 = scmp.eq.s32.totalorder %s32, 0
      %p263 = por %p261, %p262
      %p264 = scmp.ne.s32.totalorder %s252, %s253
      %p265 = scmp.eq.s32.totalorder %s33, 3
      %p266 = por %p264, %p265
      %p268 = scmp.ne.s32.totalorder %s253, %s267
      %p269 = scmp.eq.s32.totalorder %s33, 0
      %p270 = por %p268, %p269
      %s272 = sadd.s32 %s271, 1
      %p275 = scmp.eq.s32.totalorder %s27, 3
      %p276 = scmp.ne.s32.totalorder %s271, %s273
      %p277 = scmp.eq.s32.totalorder %s27, 0
      %p278 = por %p276, %p277
      %p279 = scmp.ne.s32.totalorder %s271, %s273
      %p280 = scmp.eq.s32.totalorder %s32, 3
      %p281 = por %p279, %p280
      %p282 = scmp.ne.s32.totalorder %s273, %s274
      %p283 = scmp.eq.s32.totalorder %s32, 0
      %p284 = por %p282, %p283
      %p285 = scmp.ne.s32.totalorder %s273, %s274
      %p286 = scmp.eq.s32.totalorder %s33, 3
      %p287 = por %p285, %p286
      %p289 = scmp.ne.s32.totalorder %s274, %s288
      %p290 = scmp.eq.s32.totalorder %s33, 0
      %p291 = por %p289, %p290
      %s292 = ssub.s32 %s27, %s34
      %p293 = scmp.eq.s32.totalorder %s292, 0
      %s295 = sadd.s32 %s294, 1
      %s296 = scalar_select %p293, %s294, %s295
      %p299 = pneg %p293
      %p300 = scmp.eq.s32.totalorder %s27, 3
      %p301 = por %p299, %p300
      %p302 = scmp.ne.s32.totalorder %s294, %s297
      %p303 = scmp.eq.s32.totalorder %s27, 0
      %p304 = por %p302, %p303
      %p305 = scmp.ne.s32.totalorder %s294, %s297
      %p306 = scmp.eq.s32.totalorder %s32, 3
      %p307 = por %p305, %p306
      %p308 = scmp.ne.s32.totalorder %s297, %s298
      %p309 = scmp.eq.s32.totalorder %s32, 0
      %p310 = por %p308, %p309
      %p311 = scmp.ne.s32.totalorder %s297, %s298
      %p312 = scmp.eq.s32.totalorder %s33, 3
      %p313 = por %p311, %p312
      %p315 = scmp.ne.s32.totalorder %s298, %s314
      %p316 = scmp.eq.s32.totalorder %s33, 0
      %p317 = por %p315, %p316
      %p318 = scmp.le.s32.totalorder 1, %s27
      %p319 = scmp.lt.s32.totalorder %s27, 5
      %p320 = pnand %p318, %p319
      %p321 = pneg %p320
      // Predicated region
      $region9: #{tpu_custom_call.1} parent=5 // pred_check
        _
      $region10: #{tpu_custom_call.1} parent=5 // pred_check_branch
        %323 = sbr.rel (%p320) target = $region12
      $region11: #{tpu_custom_call.1} parent=5 // pred_region
        %s324 = ssub.s32 %s27, 1
        // Predicated region
        $region13: #{tpu_custom_call.1} parent=11 // pred_check
          %p325 = pneg %p48
        $region14: #{tpu_custom_call.1} parent=11 // pred_check_branch
          %327 = sbr.rel (%p325) target = $region16
        $region15: #{tpu_custom_call.1} parent=11 // pred_region
          %s329 = ssub.s32 16, 16
          %330 = vsyncadd [#allocation8], %s329
          %333 = dma.hbm_to_smem %s0, 16, [#allocation5], [#allocation8]
        $region16: #{tpu_custom_call.1} parent=11 // pred_fallthru
          _
        // Predicated region
        $region17: #{tpu_custom_call.1} parent=11 // pred_check
          %p334 = pneg %p69
        $region18: #{tpu_custom_call.1} parent=11 // pred_check_branch
          %336 = sbr.rel (%p334) target = $region20
        $region19: #{tpu_custom_call.1} parent=11 // pred_region
          %s338 = ssub.s32 16, 16
          %339 = vsyncadd [#allocation9], %s338
          %s341 = sshll.u32 %s1, 4
          %s342 = int_to_ptr.vmem [resolvable:$true] %s341
          %344 = dma.vmem_to_smem %s342, 16, [#allocation10], [#allocation9]
        $region20: #{tpu_custom_call.1} parent=11 // pred_fallthru
          _
        // Predicated region
        $region21: #{tpu_custom_call.1} parent=11 // pred_check
          %p345 = pneg %p90
        $region22: #{tpu_custom_call.1} parent=11 // pred_check_branch
          %347 = sbr.rel (%p345) target = $region24
        $region23: #{tpu_custom_call.1} parent=11 // pred_region
          %s349 = ssub.s32 16, 16
          %350 = vsyncadd [#allocation12], %s349
          %s352 = sshll.u32 %s2, 4
          %s353 = int_to_ptr.vmem [resolvable:$true] %s352
          %355 = dma.vmem_to_smem %s353, 16, [#allocation11], [#allocation12]
        $region24: #{tpu_custom_call.1} parent=11 // pred_fallthru
          _
        // Predicated region
        $region25: #{tpu_custom_call.1} parent=11 // pred_check
          %p356 = pneg %p111
        $region26: #{tpu_custom_call.1} parent=11 // pred_check_branch
          %358 = sbr.rel (%p356) target = $region28
        $region27: #{tpu_custom_call.1} parent=11 // pred_region
          %s360 = ssub.s32 256, 256
          %361 = vsyncadd [#allocation6], %s360
          %s362 = sshll.u32 [#allocation13], 4
          %s363 = int_to_ptr.vmem [resolvable:$true] %s362
          %368 = dma.hbm_to_vmem [thread:$0]  %s3, 256, %s363, [#allocation6], 128, 128, 8
        $region28: #{tpu_custom_call.1} parent=11 // pred_fallthru
          _
        // Predicated region
        $region29: #{tpu_custom_call.1} parent=11 // pred_check
          %p369 = pneg %p132
        $region30: #{tpu_custom_call.1} parent=11 // pred_check_branch
          %371 = sbr.rel (%p369) target = $region32
        $region31: #{tpu_custom_call.1} parent=11 // pred_region
          %s373 = ssub.s32 128, 128
          %374 = vsyncadd [#allocation15], %s373
          %s375 = sshll.u32 [#allocation14], 4
          %s376 = int_to_ptr.vmem [resolvable:$true] %s375
          %381 = dma.hbm_to_vmem [thread:$0]  %s4, 128, %s376, [#allocation15], 64, 64, 4
        $region32: #{tpu_custom_call.1} parent=11 // pred_fallthru
          _
        // Predicated region
        $region33: #{tpu_custom_call.1} parent=11 // pred_check
          %p382 = pneg %p179
        $region34: #{tpu_custom_call.1} parent=11 // pred_check_branch
          %384 = sbr.rel (%p382) target = $region36
        $region35: #{tpu_custom_call.1} parent=11 // pred_region
          %s386 = ssub.s32 2048, 2048
          %387 = vsyncadd [#allocation15], %s386
          %s388 = sshll.u32 [#allocation17], 4
          %s389 = int_to_ptr.vmem [resolvable:$true] %s388
          %394 = dma.hbm_to_vmem [thread:$0]  %s6, 2048, %s389, [#allocation15], 128, 128, 8
        $region36: #{tpu_custom_call.1} parent=11 // pred_fallthru
          _
        // Predicated region
        $region37: #{tpu_custom_call.1} parent=11 // pred_check
          %p395 = pneg %p200
        $region38: #{tpu_custom_call.1} parent=11 // pred_check_branch
          %397 = sbr.rel (%p395) target = $region40
        $region39: #{tpu_custom_call.1} parent=11 // pred_region
          _
        $region40: #{tpu_custom_call.1} parent=11 // pred_fallthru
          _
        // Predicated region
        $region41: #{tpu_custom_call.1} parent=11 // pred_check
          %p398 = pneg %p221
        $region42: #{tpu_custom_call.1} parent=11 // pred_check_branch
          %400 = sbr.rel (%p398) target = $region44
        $region43: #{tpu_custom_call.1} parent=11 // pred_region
          %s402 = ssub.s32 1024, 1024
          %403 = vsyncadd [#allocation19], %s402
          %s404 = sshll.u32 [#allocation18], 4
          %s405 = int_to_ptr.vmem [resolvable:$true] %s404
          %410 = dma.hbm_to_vmem [thread:$0]  %s8, 1024, %s405, [#allocation19], 64, 64, 4
        $region44: #{tpu_custom_call.1} parent=11 // pred_fallthru
          _
        // Predicated region
        $region45: #{tpu_custom_call.1} parent=11 // pred_check
          %p411 = pneg %p242
        $region46: #{tpu_custom_call.1} parent=11 // pred_check_branch
          %413 = sbr.rel (%p411) target = $region48
        $region47: #{tpu_custom_call.1} parent=11 // pred_region
          _
        $region48: #{tpu_custom_call.1} parent=11 // pred_fallthru
          _
        // Predicated region
        $region49: #{tpu_custom_call.1} parent=11 // pred_check
          %p414 = pneg %p263
        $region50: #{tpu_custom_call.1} parent=11 // pred_check_branch
          %416 = sbr.rel (%p414) target = $region52
        $region51: #{tpu_custom_call.1} parent=11 // pred_region
          %s418 = ssub.s32 1024, 1024
          %419 = vsyncadd [#allocation19], %s418
          %s420 = sshll.u32 [#allocation20], 4
          %s421 = int_to_ptr.vmem [resolvable:$true] %s420
          %426 = dma.hbm_to_vmem [thread:$0]  %s10, 1024, %s421, [#allocation19], 64, 64, 4
        $region52: #{tpu_custom_call.1} parent=11 // pred_fallthru
          _
        // Predicated region
        $region53: #{tpu_custom_call.1} parent=11 // pred_check
          %p427 = pneg %p284
        $region54: #{tpu_custom_call.1} parent=11 // pred_check_branch
          %429 = sbr.rel (%p427) target = $region56
        $region55: #{tpu_custom_call.1} parent=11 // pred_region
          _
        $region56: #{tpu_custom_call.1} parent=11 // pred_fallthru
          _
      $region12: #{tpu_custom_call.1} parent=5 // pred_fallthru
        _
      %p430 = scmp.lt.s32.totalorder %s27, 4
      // Predicated region
      $region57: #{tpu_custom_call.1} parent=5 // pred_check
        %p431 = pneg %p430
      $region58: #{tpu_custom_call.1} parent=5 // pred_check_branch
        %433 = sbr.rel (%p431) target = $region60
      $region59: #{tpu_custom_call.1} parent=5 // pred_region
        // Predicated region
        $region61: #{tpu_custom_call.1} parent=59 // pred_check
          %p434 = pneg %p152
        $region62: #{tpu_custom_call.1} parent=59 // pred_check_branch
          %436 = sbr.rel (%p434) target = $region64
        $region63: #{tpu_custom_call.1} parent=59 // pred_region
          %s437 = sand.u32 %s27, 1
          %s438 = scalar_lea.sflag [#allocation6], %s437
          %s439 = sand.u32 %s142, 1
          %s440 = smul.addr %s439, 8
          %s441 = scalar_lea.vmem [#allocation16], %s440
          %s443 = ssub.s32 128, 128
          %444 = vsyncadd %s438, %s443
          %s445 = smul.addr %s27, 2
          %s446 = smul.addr %s445, 64
          %s447 = scalar_lea.hbm %s5, %s446
          %s448 = sshll.u32 %s441, 4
          %s449 = int_to_ptr.vmem [resolvable:$true] %s448
          %454 = dma.hbm_to_vmem [thread:$0]  %s447, 128, %s449, %s438, 64, 64, 4
        $region64: #{tpu_custom_call.1} parent=59 // pred_fallthru
          _
      $region60: #{tpu_custom_call.1} parent=5 // pred_fallthru
        _
      %p455 = scmp.le.s32.totalorder 1, %s27
      %p456 = scmp.lt.s32.totalorder %s27, 5
      %p457 = pnand %p455, %p456
      %p458 = pneg %p457
      // Predicated region
      $region65: #{tpu_custom_call.1} parent=5 // pred_check
        _
      $region66: #{tpu_custom_call.1} parent=5 // pred_check_branch
        %460 = sbr.rel (%p457) target = $region68
      $region67: #{tpu_custom_call.1} parent=5 // pred_region
        %s461 = ssub.s32 %s27, 1
        // Predicated region
        $region69: #{tpu_custom_call.1} parent=67 // pred_check
          %p462 = pneg %p48
        $region70: #{tpu_custom_call.1} parent=67 // pred_check_branch
          %464 = sbr.rel (%p462) target = $region72
        $region71: #{tpu_custom_call.1} parent=67 // pred_region
          %465 = dma.done [#allocation8], 16
        $region72: #{tpu_custom_call.1} parent=67 // pred_fallthru
          _
        // Predicated region
        $region73: #{tpu_custom_call.1} parent=67 // pred_check
          %p466 = pneg %p69
        $region74: #{tpu_custom_call.1} parent=67 // pred_check_branch
          %468 = sbr.rel (%p466) target = $region76
        $region75: #{tpu_custom_call.1} parent=67 // pred_region
          %469 = dma.done [#allocation9], 16
        $region76: #{tpu_custom_call.1} parent=67 // pred_fallthru
          _
        // Predicated region
        $region77: #{tpu_custom_call.1} parent=67 // pred_check
          %p470 = pneg %p90
        $region78: #{tpu_custom_call.1} parent=67 // pred_check_branch
          %472 = sbr.rel (%p470) target = $region80
        $region79: #{tpu_custom_call.1} parent=67 // pred_region
          %473 = dma.done [#allocation12], 16
        $region80: #{tpu_custom_call.1} parent=67 // pred_fallthru
          _
        // Predicated region
        $region81: #{tpu_custom_call.1} parent=67 // pred_check
          %p474 = pneg %p111
        $region82: #{tpu_custom_call.1} parent=67 // pred_check_branch
          %476 = sbr.rel (%p474) target = $region84
        $region83: #{tpu_custom_call.1} parent=67 // pred_region
          %477 = dma.done [#allocation6], 256
        $region84: #{tpu_custom_call.1} parent=67 // pred_fallthru
          _
        // Predicated region
        $region85: #{tpu_custom_call.1} parent=67 // pred_check
          %p478 = pneg %p132
        $region86: #{tpu_custom_call.1} parent=67 // pred_check_branch
          %480 = sbr.rel (%p478) target = $region88
        $region87: #{tpu_custom_call.1} parent=67 // pred_region
          %481 = dma.done [#allocation15], 128
        $region88: #{tpu_custom_call.1} parent=67 // pred_fallthru
          _
        %s482 = sand.u32 %s32, 1
        %s483 = scalar_lea.sflag [#allocation6], %s482
        %s484 = sand.u32 %s145, 1
        %s485 = smul.addr %s484, 8
        %s486 = scalar_lea.vmem [#allocation16], %s485
        // Predicated region
        $region89: #{tpu_custom_call.1} parent=67 // pred_check
          %p487 = pneg %p158
        $region90: #{tpu_custom_call.1} parent=67 // pred_check_branch
          %489 = sbr.rel (%p487) target = $region92
        $region91: #{tpu_custom_call.1} parent=67 // pred_region
          %490 = dma.done %s483, 128
        $region92: #{tpu_custom_call.1} parent=67 // pred_fallthru
          _
        // Predicated region
        $region93: #{tpu_custom_call.1} parent=67 // pred_check
          %p491 = pneg %p179
        $region94: #{tpu_custom_call.1} parent=67 // pred_check_branch
          %493 = sbr.rel (%p491) target = $region96
        $region95: #{tpu_custom_call.1} parent=67 // pred_region
          %494 = dma.done [#allocation15], 2048
        $region96: #{tpu_custom_call.1} parent=67 // pred_fallthru
          _
        // Predicated region
        $region97: #{tpu_custom_call.1} parent=67 // pred_check
          %p495 = pneg %p221
        $region98: #{tpu_custom_call.1} parent=67 // pred_check_branch
          %497 = sbr.rel (%p495) target = $region100
        $region99: #{tpu_custom_call.1} parent=67 // pred_region
          %498 = dma.done [#allocation19], 1024
        $region100: #{tpu_custom_call.1} parent=67 // pred_fallthru
          _
        // Predicated region
        $region101: #{tpu_custom_call.1} parent=67 // pred_check
          %p499 = pneg %p263
        $region102: #{tpu_custom_call.1} parent=67 // pred_check_branch
          %501 = sbr.rel (%p499) target = $region104
        $region103: #{tpu_custom_call.1} parent=67 // pred_region
          %502 = dma.done [#allocation19], 1024
        $region104: #{tpu_custom_call.1} parent=67 // pred_fallthru
          _
        %503 = sfence
        %p504 = pneg %p48
        %p505 = pneg %p45
        %p506 = pneg %p69
        %p507 = pneg %p66
        %p508 = pneg %p90
        %p509 = pneg %p87
        %p510 = pneg %p111
        %p511 = pneg %p108
        %p512 = pneg %p132
        %p513 = pneg %p129
        %s514 = sand.u32 %s32, 1
        %s515 = scalar_lea.sflag [#allocation6], %s514
        %s516 = sand.u32 %s145, 1
        %s517 = smul.addr %s516, 8
        %s518 = scalar_lea.vmem [#allocation16], %s517
        %p519 = pneg %p158
        %p520 = pneg %p155
        %p521 = pneg %p179
        %p522 = pneg %p176
        %p523 = pneg %p200
        %p524 = pneg %p197
        %p525 = pneg %p221
        %p526 = pneg %p218
        %p527 = pneg %p242
        %p528 = pneg %p239
        %p529 = pneg %p263
        %p530 = pneg %p260
        %p531 = pneg %p284
        %p532 = pneg %p281
        %p533 = pneg %p310
        %p534 = pneg %p307
        %s535 = sand.u32 %s297, 1
        %s536 = scalar_lea.sflag [#allocation7], %s535
        %s537 = sand.u32 %s297, 1
        %s538 = smul.addr %s537, 8
        %s539 = scalar_lea.vmem [#allocation21], %s538
        %p541 = scmp.eq.s32.totalorder %s32, 0
        // Predicated region
        $region105: #{tpu_custom_call.1} parent=67 // pred_check
          %p542 = pneg %p541
        $region106: #{tpu_custom_call.1} parent=67 // pred_check_branch
          %544 = sbr.rel (%p542) target = $region108
        $region107: #{tpu_custom_call.1} parent=67 // pred_region
          %545 = vst [vmem:[#allocation3] sm:$0xf] 0
          %546 = vst [vmem:[#allocation3 + $0x4] sm:$0xf] 0
          %547 = vst [vmem:[#allocation3 + $0x8] sm:$0xf] 0
          %548 = vst [vmem:[#allocation3 + $0xc] sm:$0xf] 0
          %549 = vst [vmem:[#allocation3 + $0x10] sm:$0xf] 0
          %550 = vst [vmem:[#allocation3 + $0x14] sm:$0xf] 0
          %551 = vst [vmem:[#allocation3 + $0x18] sm:$0xf] 0
          %552 = vst [vmem:[#allocation3 + $0x1c] sm:$0xf] 0
          %553 = vst [vmem:[#allocation3 + $0x20] sm:$0xf] 0
          %554 = vst [vmem:[#allocation3 + $0x24] sm:$0xf] 0
          %v555 = vld [vmem:[#allocation13] sm:$0xff]
          %v556 = vld [vmem:[#allocation13 + $0x8] sm:$0xff]
          %557 = vst [vmem:[#allocation2] sm:$0xff] %v555
          %558 = vst [vmem:[#allocation2 + $0x8] sm:$0xff] %v556
        $region108: #{tpu_custom_call.1} parent=67 // pred_fallthru
          _
        %v559 = vld [vmem:[#allocation2] sm:$0xff]
        %v560 = vld [vmem:[#allocation2 + $0x8] sm:$0xff]
        %v561 = vpack.c.bf16 %v560, %v559
        %s562 = sld [smem:[#allocation10 + %s32]]
        %s563 = smul.u32 %s562, 16
        %v565 = vunpack.c.l.b16 %v561
        %v566 = vunpack.c.h.b16 %v561
        %v567 = vpack.c.b16 %v565, %v565
        %v568 = vpack.c.b16 %v566, %v566
        %s571 = sshra.s32 %s563, 3
        %s572 = sand.u32 %s563, 7
        %s573 = smul.addr %s571, 4
        %s574 = scalar_lea.vmem [#allocation3], %s573
        %575 = vst [vmem:[%s574] sm:$0xf] %v567
        %576 = vst [vmem:[%s574 + $0x4] sm:$0xf] %v568
        %s577 = smul.u32 %s32, 4
        %s578 = sld [smem:[#allocation11 + %s577]]
        %s579 = smul.u32 %s578, 16
        %s580 = sshra.s32 %s579, 3
        %s581 = sand.u32 %s579, 7
        %s582 = smul.addr %s580, 4
        %s583 = scalar_lea.vmem [#allocation3], %s582
        %v584 = vld [vmem:[%s583] sm:$0xf]
        %v585 = vld [vmem:[%s583 + $0x4] sm:$0xf]
        %586 = vst [vmem:[#allocation4] sm:$0xf] %v584
        %587 = vst [vmem:[#allocation4 + $0x4] sm:$0xf] %v585
        %s588 = sadd.s32 %s577, 1
        %s589 = sld [smem:[#allocation11 + %s588]]
        %s590 = smul.u32 %s589, 16
        %s591 = sshra.s32 %s590, 3
        %s592 = sand.u32 %s590, 7
        %s593 = smul.addr %s591, 4
        %s594 = scalar_lea.vmem [#allocation3], %s593
        %v595 = vld [vmem:[%s594] sm:$0xf]
        %v596 = vld [vmem:[%s594 + $0x4] sm:$0xf]
        %597 = vst [vmem:[#allocation4 + $0x8] sm:$0xf] %v595
        %598 = vst [vmem:[#allocation4 + $0xc] sm:$0xf] %v596
        %s599 = sadd.s32 %s577, 2
        %s600 = sld [smem:[#allocation11 + %s599]]
        %s601 = smul.u32 %s600, 16
        %s602 = sshra.s32 %s601, 3
        %s603 = sand.u32 %s601, 7
        %s604 = smul.addr %s602, 4
        %s605 = scalar_lea.vmem [#allocation3], %s604
        %v606 = vld [vmem:[%s605] sm:$0xf]
        %v607 = vld [vmem:[%s605 + $0x4] sm:$0xf]
        %608 = vst [vmem:[#allocation4 + $0x10] sm:$0xf] %v606
        %609 = vst [vmem:[#allocation4 + $0x14] sm:$0xf] %v607
        %s610 = sadd.s32 %s577, 3
        %s611 = sld [smem:[#allocation11 + %s610]]
        %s612 = smul.u32 %s611, 16
        %s613 = sshra.s32 %s612, 3
        %s614 = sand.u32 %s612, 7
        %s615 = smul.addr %s613, 4
        %s616 = scalar_lea.vmem [#allocation3], %s615
        %v617 = vld [vmem:[%s616] sm:$0xf]
        %v618 = vld [vmem:[%s616 + $0x4] sm:$0xf]
        %619 = vst [vmem:[#allocation4 + $0x18] sm:$0xf] %v617
        %620 = vst [vmem:[#allocation4 + $0x1c] sm:$0xf] %v618
        %v621 = vld [vmem:[#allocation14] sm:$0xf]
        %v622 = vld [vmem:[#allocation14 + $0x4] sm:$0xf]
        %v623 = vld [vmem:[#allocation4] sm:$0xf]
        %v624 = vld [vmem:[#allocation4 + $0x4] sm:$0xf]
        %v625 = vld [vmem:[#allocation4 + $0x8] sm:$0xf]
        %v626 = vld [vmem:[#allocation4 + $0xc] sm:$0xf]
        %v627 = vld [vmem:[#allocation4 + $0x10] sm:$0xf]
        %v628 = vld [vmem:[#allocation4 + $0x14] sm:$0xf]
        %v629 = vld [vmem:[#allocation4 + $0x18] sm:$0xf]
        %v630 = vld [vmem:[#allocation4 + $0x1c] sm:$0xf]
        %v633 = vunpack.c.l.b16 %v621
        %v634 = vunpack.c.l.b16 %v622
        %v635 = vpack.c.b16 %v634, %v633
        %v644 = vunpack.c.l.b16 %v623
        %v645 = vunpack.c.l.b16 %v624
        %v646 = vunpack.c.l.b16 %v625
        %v647 = vunpack.c.l.b16 %v626
        %v648 = vunpack.c.l.b16 %v627
        %v649 = vunpack.c.l.b16 %v628
        %v650 = vunpack.c.l.b16 %v629
        %v651 = vunpack.c.l.b16 %v630
        %v652 = vpack.c.b16 %v645, %v644
        %v653 = vpack.c.b16 %v647, %v646
        %v654 = vpack.c.b16 %v649, %v648
        %v655 = vpack.c.b16 %v651, %v650
        %vm660 = vcmask 523264
        %v662 = vsel %vm660, %v635, 0
        %664 = vmatprep.subr.bf16.mxu0 0
        %665 = vmatpush1.bf16.msra.mxu0 0
        %666 = vmatprep.subr.bf16.mxu0 0
        %667 = vmatpush1.bf16.msra.mxu0 0
        %668 = vmatprep.subr.bf16.mxu0 0
        %669 = vmatpush1.bf16.msra.mxu0 0
        %670 = vmatprep.subr.bf16.mxu0 0
        %671 = vmatpush1.bf16.msra.mxu0 0
        %672 = vmatprep.subr.bf16.mxu0 0
        %673 = vmatpush1.bf16.msra.mxu0 %v655
        %674 = vmatprep.subr.bf16.mxu0 0
        %675 = vmatpush1.bf16.msra.mxu0 %v654
        %676 = vmatprep.subr.bf16.mxu0 0
        %677 = vmatpush1.bf16.msra.mxu0 %v653
        %678 = vmatprep.subr.bf16.mxu0 0
        %679 = vmatpush1.bf16.msra.mxu0 %v652
        %680 = vmatprep.subr.bf16.mxu0 0
        %681 = vmatpush2.bf16.msra.mxu0 0
        %682 = vmatprep.subr.bf16.mxu0 0
        %683 = vmatpush2.bf16.msra.mxu0 0
        %684 = vmatprep.subr.bf16.mxu0 0
        %685 = vmatpush2.bf16.msra.mxu0 0
        %686 = vmatprep.subr.bf16.mxu0 0
        %687 = vmatpush2.bf16.msra.mxu0 0
        %688 = vmatprep.subr.bf16.mxu0 0
        %689 = vmatpush2.bf16.msra.mxu0 0
        %690 = vmatprep.subr.bf16.mxu0 0
        %691 = vmatpush2.bf16.msra.mxu0 0
        %692 = vmatprep.subr.bf16.mxu0 0
        %693 = vmatpush2.bf16.msra.mxu0 0
        %694 = vmatprep.subr.bf16.mxu0 0
        %695 = vmatpush2.bf16.msra.mxu0 0
        %696 = vmatprep.mubr.bf16.mxu0 0
        %697 = vmatmul.mubr.bf16.gmra.mxu0 %v662
        %v698 = vpop.f32.mrf.mxu0
        %v699 = vadd.f32 0.0, %v698
        %v700 = vpop.f32.mrf.mxu0
        %v701 = vpop.f32.mrf.mxu0
        %v702 = vadd.f32 0.0, %v701
        %v703 = vpop.f32.mrf.mxu0
        %704 = vdwg.mxu0
        %v705 = vpack.c.bf16 %v702, %v699
        %v706 = vld [vmem:[#allocation17] sm:$0xff]
        %v707 = vld [vmem:[#allocation17 + $0x8] sm:$0xff]
        %v708 = vld [vmem:[#allocation17 + $0x10] sm:$0xff]
        %v709 = vld [vmem:[#allocation17 + $0x18] sm:$0xff]
        %v710 = vld [vmem:[#allocation17 + $0x20] sm:$0xff]
        %v711 = vld [vmem:[#allocation17 + $0x28] sm:$0xff]
        %v712 = vld [vmem:[#allocation17 + $0x30] sm:$0xff]
        %v713 = vld [vmem:[#allocation17 + $0x38] sm:$0xff]
        %v714 = vld [vmem:[#allocation17 + $0x40] sm:$0xff]
        %v715 = vld [vmem:[#allocation17 + $0x48] sm:$0xff]
        %v716 = vld [vmem:[#allocation17 + $0x50] sm:$0xff]
        %v717 = vld [vmem:[#allocation17 + $0x58] sm:$0xff]
        %v718 = vld [vmem:[#allocation17 + $0x60] sm:$0xff]
        %v719 = vld [vmem:[#allocation17 + $0x68] sm:$0xff]
        %v720 = vld [vmem:[#allocation17 + $0x70] sm:$0xff]
        %v721 = vld [vmem:[#allocation17 + $0x78] sm:$0xff]
        %v738 = vunpack.c.l.b16 %v706
        %v739 = vunpack.c.h.b16 %v706
        %v740 = vunpack.c.l.b16 %v707
        %v741 = vunpack.c.h.b16 %v707
        %v742 = vunpack.c.l.b16 %v708
        %v743 = vunpack.c.h.b16 %v708
        %v744 = vunpack.c.l.b16 %v709
        %v745 = vunpack.c.h.b16 %v709
        %v746 = vunpack.c.l.b16 %v710
        %v747 = vunpack.c.h.b16 %v710
        %v748 = vunpack.c.l.b16 %v711
        %v749 = vunpack.c.h.b16 %v711
        %v750 = vunpack.c.l.b16 %v712
        %v751 = vunpack.c.h.b16 %v712
        %v752 = vunpack.c.l.b16 %v713
        %v753 = vunpack.c.h.b16 %v713
        %v754 = vunpack.c.l.b16 %v714
        %v755 = vunpack.c.h.b16 %v714
        %v756 = vunpack.c.l.b16 %v715
        %v757 = vunpack.c.h.b16 %v715
        %v758 = vunpack.c.l.b16 %v716
        %v759 = vunpack.c.h.b16 %v716
        %v760 = vunpack.c.l.b16 %v717
        %v761 = vunpack.c.h.b16 %v717
        %v762 = vunpack.c.l.b16 %v718
        %v763 = vunpack.c.h.b16 %v718
        %v764 = vunpack.c.l.b16 %v719
        %v765 = vunpack.c.h.b16 %v719
        %v766 = vunpack.c.l.b16 %v720
        %v767 = vunpack.c.h.b16 %v720
        %v768 = vunpack.c.l.b16 %v721
        %v769 = vunpack.c.h.b16 %v721
        %v770 = vpack.c.b16 %v740, %v738
        %v771 = vpack.c.b16 %v741, %v739
        %v772 = vpack.c.b16 %v744, %v742
        %v773 = vpack.c.b16 %v745, %v743
        %v774 = vpack.c.b16 %v748, %v746
        %v775 = vpack.c.b16 %v749, %v747
        %v776 = vpack.c.b16 %v752, %v750
        %v777 = vpack.c.b16 %v753, %v751
        %v778 = vpack.c.b16 %v756, %v754
        %v779 = vpack.c.b16 %v757, %v755
        %v780 = vpack.c.b16 %v760, %v758
        %v781 = vpack.c.b16 %v761, %v759
        %v782 = vpack.c.b16 %v764, %v762
        %v783 = vpack.c.b16 %v765, %v763
        %v784 = vpack.c.b16 %v768, %v766
        %v785 = vpack.c.b16 %v769, %v767
        %802 = vmatprep.subr.bf16.mxu0 %v785
        %803 = vmatpush1.bf16.msra.mxu0 %v784
        %804 = vmatprep.subr.bf16.mxu0 %v783
        %805 = vmatpush1.bf16.msra.mxu0 %v782
        %806 = vmatprep.subr.bf16.mxu0 %v781
        %807 = vmatpush1.bf16.msra.mxu0 %v780
        %808 = vmatprep.subr.bf16.mxu0 %v779
        %809 = vmatpush1.bf16.msra.mxu0 %v778
        %810 = vmatprep.subr.bf16.mxu0 %v777
        %811 = vmatpush1.bf16.msra.mxu0 %v776
        %812 = vmatprep.subr.bf16.mxu0 %v775
        %813 = vmatpush1.bf16.msra.mxu0 %v774
        %814 = vmatprep.subr.bf16.mxu0 %v773
        %815 = vmatpush1.bf16.msra.mxu0 %v772
        %816 = vmatprep.subr.bf16.mxu0 %v771
        %817 = vmatpush1.bf16.msra.mxu0 %v770
        %818 = vmatprep.subr.bf16.mxu0 0
        %819 = vmatpush2.bf16.msra.mxu0 0
        %820 = vmatprep.subr.bf16.mxu0 0
        %821 = vmatpush2.bf16.msra.mxu0 0
        %822 = vmatprep.subr.bf16.mxu0 0
        %823 = vmatpush2.bf16.msra.mxu0 0
        %824 = vmatprep.subr.bf16.mxu0 0
        %825 = vmatpush2.bf16.msra.mxu0 0
        %826 = vmatprep.subr.bf16.mxu0 0
        %827 = vmatpush2.bf16.msra.mxu0 0
        %828 = vmatprep.subr.bf16.mxu0 0
        %829 = vmatpush2.bf16.msra.mxu0 0
        %830 = vmatprep.subr.bf16.mxu0 0
        %831 = vmatpush2.bf16.msra.mxu0 0
        %832 = vmatprep.subr.bf16.mxu0 0
        %833 = vmatpush2.bf16.msra.mxu0 0
        %834 = vmatprep.mubr.bf16.mxu0 0
        %835 = vmatmul.mubr.bf16.gmra.mxu0 %v705
        %v836 = vpop.f32.mrf.mxu0
        %v837 = vadd.f32 0.0, %v836
        %v838 = vpop.f32.mrf.mxu0
        %v839 = vadd.f32 0.0, %v838
        %v840 = vpop.f32.mrf.mxu0
        %v841 = vadd.f32 0.0, %v840
        %v842 = vpop.f32.mrf.mxu0
        %v843 = vadd.f32 0.0, %v842
        %844 = vdwg.mxu0
        %v845 = vld [vmem:[%s7] sm:$0x1]
        %v847 = vlaneseq
        %v848 = vshrl.u32 %v847, 7
        %v849 = vsub.s32 0, %v848
        %v850 = vrot.slane %v845, %v849
        %v852 = vadd.f32 %v839, %v850
        %v853 = vadd.f32 %v843, %v850
        %v854 = vsub.f32 0.0, %v852
        %v855 = vsub.f32 0.0, %v853
        %v856 = vmul.f32 %v854, 1.442695
        %v857 = vpow.pop %v856
        %v858 = vmul.f32 %v855, 1.442695
        %v859 = vpow.pop %v858
        %v860 = vadd.f32 %v857, 1.0
        %v861 = vadd.f32 %v859, 1.0
        %v862 = vrcp.pop %v860
        %v863 = vrcp.pop %v861
        %v864 = vsub.f32 1.0, %v862
        %v865 = vsub.f32 1.0, %v863
        %v866 = vsub.f32 %v837, %v559
        %v867 = vsub.f32 %v841, %v560
        %v868 = vmul.f32 %v864, %v866
        %v869 = vmul.f32 %v865, %v867
        %v870 = vld [vmem:[%s486] sm:$0xf]
        %v871 = vld [vmem:[%s486 + $0x4] sm:$0xf]
        %v872 = vunpack.c.l.bf16 %v870
        %v873 = vunpack.c.l.bf16 %v871
        %v874 = vmul.f32 %v868, %v872
        %v875 = vmul.f32 %v869, %v873
        %v876 = vmax.f32 %v874, 0.0
        %v877 = vmax.f32 %v875, 0.0
        %v878 = vpack.c.bf16 %v877, %v876
        %v879 = vld [vmem:[#allocation18] sm:$0xf]
        %v880 = vld [vmem:[#allocation18 + $0x4] sm:$0xf]
        %v881 = vld [vmem:[#allocation18 + $0x8] sm:$0xf]
        %v882 = vld [vmem:[#allocation18 + $0xc] sm:$0xf]
        %v883 = vld [vmem:[#allocation18 + $0x10] sm:$0xf]
        %v884 = vld [vmem:[#allocation18 + $0x14] sm:$0xf]
        %v885 = vld [vmem:[#allocation18 + $0x18] sm:$0xf]
        %v886 = vld [vmem:[#allocation18 + $0x1c] sm:$0xf]
        %v887 = vld [vmem:[#allocation18 + $0x20] sm:$0xf]
        %v888 = vld [vmem:[#allocation18 + $0x24] sm:$0xf]
        %v889 = vld [vmem:[#allocation18 + $0x28] sm:$0xf]
        %v890 = vld [vmem:[#allocation18 + $0x2c] sm:$0xf]
        %v891 = vld [vmem:[#allocation18 + $0x30] sm:$0xf]
        %v892 = vld [vmem:[#allocation18 + $0x34] sm:$0xf]
        %v893 = vld [vmem:[#allocation18 + $0x38] sm:$0xf]
        %v894 = vld [vmem:[#allocation18 + $0x3c] sm:$0xf]
        %v895 = vld [vmem:[%s9] sm:$0x1]
        %v897 = vlaneseq
        %v898 = vshrl.u32 %v897, 7
        %v899 = vsub.s32 0, %v898
        %v900 = vrot.slane %v895, %v899
        %v918 = vunpack.c.l.b16 %v879
        %v919 = vunpack.c.l.b16 %v880
        %v920 = vunpack.c.l.b16 %v881
        %v921 = vunpack.c.l.b16 %v882
        %v922 = vunpack.c.l.b16 %v883
        %v923 = vunpack.c.l.b16 %v884
        %v924 = vunpack.c.l.b16 %v885
        %v925 = vunpack.c.l.b16 %v886
        %v926 = vunpack.c.l.b16 %v887
        %v927 = vunpack.c.l.b16 %v888
        %v928 = vunpack.c.l.b16 %v889
        %v929 = vunpack.c.l.b16 %v890
        %v930 = vunpack.c.l.b16 %v891
        %v931 = vunpack.c.l.b16 %v892
        %v932 = vunpack.c.l.b16 %v893
        %v933 = vunpack.c.l.b16 %v894
        %v934 = vpack.c.b16 %v919, %v918
        %v935 = vpack.c.b16 %v921, %v920
        %v936 = vpack.c.b16 %v923, %v922
        %v937 = vpack.c.b16 %v925, %v924
        %v938 = vpack.c.b16 %v927, %v926
        %v939 = vpack.c.b16 %v929, %v928
        %v940 = vpack.c.b16 %v931, %v930
        %v941 = vpack.c.b16 %v933, %v932
        %950 = vmatprep.subr.bf16.mxu0 0
        %951 = vmatpush1.bf16.msra.mxu0 %v941
        %952 = vmatprep.subr.bf16.mxu0 0
        %953 = vmatpush1.bf16.msra.mxu0 %v940
        %954 = vmatprep.subr.bf16.mxu0 0
        %955 = vmatpush1.bf16.msra.mxu0 %v939
        %956 = vmatprep.subr.bf16.mxu0 0
        %957 = vmatpush1.bf16.msra.mxu0 %v938
        %958 = vmatprep.subr.bf16.mxu0 0
        %959 = vmatpush1.bf16.msra.mxu0 %v937
        %960 = vmatprep.subr.bf16.mxu0 0
        %961 = vmatpush1.bf16.msra.mxu0 %v936
        %962 = vmatprep.subr.bf16.mxu0 0
        %963 = vmatpush1.bf16.msra.mxu0 %v935
        %964 = vmatprep.subr.bf16.mxu0 0
        %965 = vmatpush1.bf16.msra.mxu0 %v934
        %966 = vmatprep.subr.bf16.mxu0 0
        %967 = vmatpush2.bf16.msra.mxu0 0
        %968 = vmatprep.subr.bf16.mxu0 0
        %969 = vmatpush2.bf16.msra.mxu0 0
        %970 = vmatprep.subr.bf16.mxu0 0
        %971 = vmatpush2.bf16.msra.mxu0 0
        %972 = vmatprep.subr.bf16.mxu0 0
        %973 = vmatpush2.bf16.msra.mxu0 0
        %974 = vmatprep.subr.bf16.mxu0 0
        %975 = vmatpush2.bf16.msra.mxu0 0
        %976 = vmatprep.subr.bf16.mxu0 0
        %977 = vmatpush2.bf16.msra.mxu0 0
        %978 = vmatprep.subr.bf16.mxu0 0
        %979 = vmatpush2.bf16.msra.mxu0 0
        %980 = vmatprep.subr.bf16.mxu0 0
        %981 = vmatpush2.bf16.msra.mxu0 0
        %982 = vmatprep.mubr.bf16.mxu0 0
        %983 = vmatmul.mubr.bf16.gmra.mxu0 %v878
        %v984 = vpop.f32.mrf.mxu0
        %v985 = vadd.f32 %v900, %v984
        %v986 = vpop.f32.mrf.mxu0
        %v987 = vpop.f32.mrf.mxu0
        %v988 = vadd.f32 %v900, %v987
        %v989 = vpop.f32.mrf.mxu0
        %990 = vdwg.mxu0
        %v991 = vpack.c.bf16 %v988, %v985
        %v992 = vld [vmem:[#allocation20] sm:$0xf]
        %v993 = vld [vmem:[#allocation20 + $0x4] sm:$0xf]
        %v994 = vld [vmem:[#allocation20 + $0x8] sm:$0xf]
        %v995 = vld [vmem:[#allocation20 + $0xc] sm:$0xf]
        %v996 = vld [vmem:[#allocation20 + $0x10] sm:$0xf]
        %v997 = vld [vmem:[#allocation20 + $0x14] sm:$0xf]
        %v998 = vld [vmem:[#allocation20 + $0x18] sm:$0xf]
        %v999 = vld [vmem:[#allocation20 + $0x1c] sm:$0xf]
        %v1000 = vld [vmem:[#allocation20 + $0x20] sm:$0xf]
        %v1001 = vld [vmem:[#allocation20 + $0x24] sm:$0xf]
        %v1002 = vld [vmem:[#allocation20 + $0x28] sm:$0xf]
        %v1003 = vld [vmem:[#allocation20 + $0x2c] sm:$0xf]
        %v1004 = vld [vmem:[#allocation20 + $0x30] sm:$0xf]
        %v1005 = vld [vmem:[#allocation20 + $0x34] sm:$0xf]
        %v1006 = vld [vmem:[#allocation20 + $0x38] sm:$0xf]
        %v1007 = vld [vmem:[#allocation20 + $0x3c] sm:$0xf]
        %v1008 = vld [vmem:[%s11] sm:$0x1]
        %v1010 = vlaneseq
        %v1011 = vshrl.u32 %v1010, 7
        %v1012 = vsub.s32 0, %v1011
        %v1013 = vrot.slane %v1008, %v1012
        %v1031 = vunpack.c.l.b16 %v992
        %v1032 = vunpack.c.l.b16 %v993
        %v1033 = vunpack.c.l.b16 %v994
        %v1034 = vunpack.c.l.b16 %v995
        %v1035 = vunpack.c.l.b16 %v996
        %v1036 = vunpack.c.l.b16 %v997
        %v1037 = vunpack.c.l.b16 %v998
        %v1038 = vunpack.c.l.b16 %v999
        %v1039 = vunpack.c.l.b16 %v1000
        %v1040 = vunpack.c.l.b16 %v1001
        %v1041 = vunpack.c.l.b16 %v1002
        %v1042 = vunpack.c.l.b16 %v1003
        %v1043 = vunpack.c.l.b16 %v1004
        %v1044 = vunpack.c.l.b16 %v1005
        %v1045 = vunpack.c.l.b16 %v1006
        %v1046 = vunpack.c.l.b16 %v1007
        %v1047 = vpack.c.b16 %v1032, %v1031
        %v1048 = vpack.c.b16 %v1034, %v1033
        %v1049 = vpack.c.b16 %v1036, %v1035
        %v1050 = vpack.c.b16 %v1038, %v1037
        %v1051 = vpack.c.b16 %v1040, %v1039
        %v1052 = vpack.c.b16 %v1042, %v1041
        %v1053 = vpack.c.b16 %v1044, %v1043
        %v1054 = vpack.c.b16 %v1046, %v1045
        %1063 = vmatprep.subr.bf16.mxu0 0
        %1064 = vmatpush1.bf16.msra.mxu0 %v1054
        %1065 = vmatprep.subr.bf16.mxu0 0
        %1066 = vmatpush1.bf16.msra.mxu0 %v1053
        %1067 = vmatprep.subr.bf16.mxu0 0
        %1068 = vmatpush1.bf16.msra.mxu0 %v1052
        %1069 = vmatprep.subr.bf16.mxu0 0
        %1070 = vmatpush1.bf16.msra.mxu0 %v1051
        %1071 = vmatprep.subr.bf16.mxu0 0
        %1072 = vmatpush1.bf16.msra.mxu0 %v1050
        %1073 = vmatprep.subr.bf16.mxu0 0
        %1074 = vmatpush1.bf16.msra.mxu0 %v1049
        %1075 = vmatprep.subr.bf16.mxu0 0
        %1076 = vmatpush1.bf16.msra.mxu0 %v1048
        %1077 = vmatprep.subr.bf16.mxu0 0
        %1078 = vmatpush1.bf16.msra.mxu0 %v1047
        %1079 = vmatprep.subr.bf16.mxu0 0
        %1080 = vmatpush2.bf16.msra.mxu0 0
        %1081 = vmatprep.subr.bf16.mxu0 0
        %1082 = vmatpush2.bf16.msra.mxu0 0
        %1083 = vmatprep.subr.bf16.mxu0 0
        %1084 = vmatpush2.bf16.msra.mxu0 0
        %1085 = vmatprep.subr.bf16.mxu0 0
        %1086 = vmatpush2.bf16.msra.mxu0 0
        %1087 = vmatprep.subr.bf16.mxu0 0
        %1088 = vmatpush2.bf16.msra.mxu0 0
        %1089 = vmatprep.subr.bf16.mxu0 0
        %1090 = vmatpush2.bf16.msra.mxu0 0
        %1091 = vmatprep.subr.bf16.mxu0 0
        %1092 = vmatpush2.bf16.msra.mxu0 0
        %1093 = vmatprep.subr.bf16.mxu0 0
        %1094 = vmatpush2.bf16.msra.mxu0 0
        %1095 = vmatprep.mubr.bf16.mxu0 0
        %1096 = vmatmul.mubr.bf16.gmra.mxu0 %v991
        %v1097 = vpop.f32.mrf.mxu0
        %v1098 = vadd.f32 %v1013, %v1097
        %v1099 = vpop.f32.mrf.mxu0
        %v1100 = vpop.f32.mrf.mxu0
        %v1101 = vadd.f32 %v1013, %v1100
        %v1102 = vpop.f32.mrf.mxu0
        %1103 = vdwg.mxu0
        %v1104 = vsub.f32 0.0, %v1098
        %v1105 = vsub.f32 0.0, %v1101
        %v1106 = vmul.f32 %v1104, 1.442695
        %v1107 = vpow.pop %v1106
        %v1108 = vmul.f32 %v1105, 1.442695
        %v1109 = vpow.pop %v1108
        %v1110 = vadd.f32 %v1107, 1.0
        %v1111 = vadd.f32 %v1109, 1.0
        %v1112 = vrcp.pop %v1110
        %v1113 = vrcp.pop %v1111
        %v1114 = vmul.f32 %v1112, %v985
        %v1115 = vmul.f32 %v1113, %v988
        %s1116 = sld [smem:[#allocation5 + %s32]]
        %v1117 = vstv %s1116
        %v1118 = vmul.f32 %v1117, %v1114
        %v1119 = vmul.f32 %v1117, %v1115
        %v1120 = vadd.f32 %v559, %v1118
        %v1121 = vadd.f32 %v560, %v1119
        %1122 = vst [vmem:[#allocation2] sm:$0xff] %v1120
        %1123 = vst [vmem:[#allocation2 + $0x8] sm:$0xff] %v1121
        %v1124 = vpack.c.bf16 %v1121, %v1120
        %v1126 = vunpack.c.l.b16 %v1124
        %v1127 = vunpack.c.h.b16 %v1124
        %v1128 = vpack.c.b16 %v1126, %v1126
        %v1129 = vpack.c.b16 %v1127, %v1127
        %1132 = vst [vmem:[%s539] sm:$0xf] %v1128
        %1133 = vst [vmem:[%s539 + $0x4] sm:$0xf] %v1129
        %s1134 = sand.u32 %s297, 1
        %s1135 = scalar_lea.sflag [#allocation7], %s1134
        %s1136 = sand.u32 %s297, 1
        %s1137 = smul.addr %s1136, 8
        %s1138 = scalar_lea.vmem [#allocation21], %s1137
        // Predicated region
        $region109: #{tpu_custom_call.1} parent=67 // pred_check
          %p1139 = pneg %p307
        $region110: #{tpu_custom_call.1} parent=67 // pred_check_branch
          %1141 = sbr.rel (%p1139) target = $region112
        $region111: #{tpu_custom_call.1} parent=67 // pred_region
          %s1143 = ssub.s32 128, 128
          %1144 = vsyncadd %s1135, %s1143
          %s1145 = smul.addr %s32, 2
          %s1146 = smul.addr %s1145, 64
          %s1147 = scalar_lea.hbm %s12, %s1146
          %s1148 = sshll.u32 %s1138, 4
          %s1149 = int_to_ptr.vmem [resolvable:$true] %s1148
          %1154 = dma.vmem_to_hbm [thread:$0]  %s1149, 128, %s1147, %s1135, 64, 64, 4
        $region112: #{tpu_custom_call.1} parent=67 // pred_fallthru
          _
      $region68: #{tpu_custom_call.1} parent=5 // pred_fallthru
        _
      %p1155 = scmp.le.s32.totalorder 2, %s27
      // Predicated region
      $region113: #{tpu_custom_call.1} parent=5 // pred_check
        %p1156 = pneg %p1155
      $region114: #{tpu_custom_call.1} parent=5 // pred_check_branch
        %1158 = sbr.rel (%p1156) target = $region116
      $region115: #{tpu_custom_call.1} parent=5 // pred_region
        %s1159 = ssub.s32 %s27, 2
        // Predicated region
        $region117: #{tpu_custom_call.1} parent=115 // pred_check
          %p1160 = pneg %p313
        $region118: #{tpu_custom_call.1} parent=115 // pred_check_branch
          %1162 = sbr.rel (%p1160) target = $region120
        $region119: #{tpu_custom_call.1} parent=115 // pred_region
          %s1163 = sand.u32 %s298, 1
          %s1164 = scalar_lea.sflag [#allocation7], %s1163
          %s1165 = sand.u32 %s298, 1
          %s1166 = smul.addr %s1165, 8
          %s1167 = scalar_lea.vmem [#allocation21], %s1166
          %1168 = dma.done %s1164, 128
        $region120: #{tpu_custom_call.1} parent=115 // pred_fallthru
          _
      $region116: #{tpu_custom_call.1} parent=5 // pred_fallthru
        _
    $region6: #{tpu_custom_call.1} parent=1 // loop_footer
      %s31 = sadd.s32 1, %s27
    $region7: #{tpu_custom_call.1} parent=1 // loop_footer_branch
      %26 = sbr.rel target = $region3
    $region8: #{tpu_custom_call.1} parent=1 // loop_exit
      _
    %1169 = vsyncpa [#allocation6], 1
    %s1170 = scalar_lea.sflag [#allocation6], 1
    %1171 = vsyncpa %s1170, 1
    %1172 = vsyncpa [#allocation15], 1
    %1173 = vsyncpa [#allocation19], 1
    %1174 = vsyncpa [#allocation7], 1
    %s1175 = scalar_lea.sflag [#allocation7], 1
    %1176 = vsyncpa %s1175, 1
    %1177 = vsyncpa [#allocation8], 1
    %s1178 = scalar_lea.sflag [#allocation8], 1
    %1179 = vsyncpa %s1178, 1
    %1180 = vsyncpa [#allocation9], 1
    %s1181 = scalar_lea.sflag [#allocation9], 1
    %1182 = vsyncpa %s1181, 1
    %1183 = vsyncpa [#allocation12], 1

</llo_original>
